<compile_context>
chip_gen: v7x
topology: tpu7x:2x2x1
jax: 0.10.0
libtpu: 0.0.40
codegen_flags: <defaults>
</compile_context>

<pallas_src>
import functools

import jax
import jax.numpy as jnp
import numpy as np
from jax import lax
from jax.experimental import pallas as pl
from jax.experimental.pallas import tpu as pltpu


def memory_lstm_kernel(ids_ref, xw_ref, whh_t_ref, out_ref, mem_sc,
                       *, hidden_size, memory_size, words_per_group):
    """One grid step == one sentence, processed word-by-word (serial recurrence).

    ids_ref  : (B*T,) int32 SMEM (scalar prefetch) -- token id at flat index s*T + w
    xw_ref   : (T, 4*Hp) VMEM (bf16 or f32) -- precomputed x @ W_ih^T + b for this sentence,
                                               gate blocks ordered (i, f, o, g), each Hp wide
    whh_t_ref: (Hp, 4*Hp) VMEM (bf16 or f32) -- recurrent weights, resident across the grid
    out_ref  : (T, Hp) f32 VMEM  -- hidden states for this sentence (lanes [H, Hp) are 0)
    mem_sc   : (Vp, Hp) f32 VMEM scratch -- word-memory table; only lanes [H-M, H) of each
               row are semantically meaningful.
    """
    s = pl.program_id(0)
    T, Hp = out_ref.shape
    H = hidden_size
    M = memory_size
    G = words_per_group

    # Empty word memory == initial_memory (zeros); init once, persists across sentences.
    @pl.when(s == 0)
    def _():
        mem_sc[...] = jnp.zeros_like(mem_sc)

    # Lanes [H-M, H) of the cell state come from / go to the word memory table.
    lane = lax.broadcasted_iota(jnp.int32, (1, Hp), 1)
    tail_mask = jnp.logical_and(lane >= (H - M), lane < H)

    compute_dtype = whh_t_ref.dtype

    def sigmoid(v):
        # Exact identity; a single EUP tanh per gate block instead of exp + divide.
        return 0.5 * jnp.tanh(0.5 * v) + 0.5

    def chunk(g, carry):
        h_prev, c_prev = carry                                   # f32 (1, Hp)
        w0 = pl.multiple_of(g * G, G)
        # One aligned load + upcast per 8 words.
        xw_rows = xw_ref[pl.ds(w0, G), :].astype(jnp.float32)    # (G, 4*Hp)
        h_rows = []
        for j in range(G):
            tid = ids_ref[s * T + w0 + j]
            mem_row = mem_sc[pl.ds(tid, 1), :]                   # (1, Hp)
            # previous_cell_state = cat(c_prev[:H-M], memory[token]) — as a masked select.
            c_eff = jnp.where(tail_mask, mem_row, c_prev)        # (1, Hp)

            gates = xw_rows[j:j + 1, :] + jnp.dot(
                h_prev.astype(compute_dtype), whh_t_ref[...],
                preferred_element_type=jnp.float32)              # (1, 4*Hp) f32

            sg = sigmoid(gates[:, :3 * Hp])                      # fused over (i, f, o)
            i_g = sg[:, 0 * Hp:1 * Hp]
            f_g = sg[:, 1 * Hp:2 * Hp]
            o_g = sg[:, 2 * Hp:3 * Hp]
            g_g = jnp.tanh(gates[:, 3 * Hp:4 * Hp])

            c_new = f_g * c_eff + i_g * g_g
            h_new = o_g * jnp.tanh(c_new)

            # memory[token] = c[H-M:H]; store the full row, only tail lanes are ever read.
            mem_sc[pl.ds(tid, 1), :] = c_new
            h_rows.append(h_new)
            h_prev, c_prev = h_new, c_new

        # One (G, Hp) sublane-aligned, lane-dense store per 8 words.
        out_ref[pl.ds(w0, G), :] = jnp.concatenate(h_rows, axis=0)
        return h_prev, c_prev

    h0 = jnp.zeros((1, Hp), jnp.float32)
    c0 = jnp.zeros((1, Hp), jnp.float32)
    lax.fori_loop(0, T // G, chunk, (h0, c0))


def memory_lstm_forward(x, token_ids, w_ih, w_hh, b_ih, b_hh, memory_size, vocab_size,
                        *, compute_dtype=jnp.bfloat16):
    """x: (T, B, I) f32 (batch_first=False), token_ids: (B, T) int32, PyTorch LSTMCell params.

    Returns (hidden_states (T, B, H) f32, last_hidden (B, H) f32).
    """
    T, B, I = x.shape
    H = w_hh.shape[1]
    M = memory_size
    LANE = 128
    G = 8
    Hp = ((H + LANE - 1) // LANE) * LANE
    Vp = max(8, ((vocab_size + 7) // 8) * 8)
    assert T % G == 0, "word dimension must be a multiple of 8"
    assert M <= H
    # TODO(synk): ragged sentence lengths / T padding (padded positions emit initial_hidden)
    # are not implemented; all sentences are assumed full length.

    # Reorder gate blocks (i, f, g, o) -> (i, f, o, g) so the kernel fuses the sigmoids, and
    # zero-pad every gate block H -> Hp (and the h input dim for W_hh) so gate slices are
    # whole lane tiles.  Zero padding keeps padded gate lanes at 0 and padded c/h lanes at 0.
    def reorder_and_pad(p, pad_cols=False):
        p = jnp.asarray(p, jnp.float32)
        blocks = jnp.split(p, 4, axis=0)
        blocks = [blocks[0], blocks[1], blocks[3], blocks[2]]       # i, f, g, o -> i, f, o, g
        padded = []
        for blk in blocks:
            pad_width = [(0, Hp - H)] + [(0, 0)] * (blk.ndim - 1)
            padded.append(jnp.pad(blk, pad_width))
        out = jnp.concatenate(padded, axis=0)
        if pad_cols:
            out = jnp.pad(out, [(0, 0), (0, Hp - H)])
        return out

    w_ih_r = reorder_and_pad(w_ih)                                   # (4Hp, I)
    w_hh_r = reorder_and_pad(w_hh, pad_cols=True)                    # (4Hp, Hp)
    b_r = reorder_and_pad(jnp.asarray(b_ih, jnp.float32)
                          + jnp.asarray(b_hh, jnp.float32))          # (4Hp,)

    # Hoisted input projection: one (B*T, I) x (I, 4Hp) matmul outside the serial chain.
    # Row s*T + w corresponds to x[w, s].
    x_bt = jnp.transpose(x.astype(jnp.float32), (1, 0, 2)).reshape(B * T, I)
    xw = (x_bt @ w_ih_r.T + b_r[None, :]).reshape(B, T, 4 * Hp).astype(compute_dtype)
    whh_t = w_hh_r.T.astype(compute_dtype)                           # (Hp, 4Hp)
    ids_flat = token_ids.astype(jnp.int32).reshape(B * T)            # flat index s*T + w

    grid_spec = pltpu.PrefetchScalarGridSpec(
        num_scalar_prefetch=1,
        grid=(B,),
        in_specs=[
            # Per-sentence xW tile (pipelined); last two block dims == full array dims,
            # so bf16 tiling is satisfied even for small T.
            pl.BlockSpec((None, T, 4 * Hp), lambda s, ids: (s, 0, 0)),
            # Recurrent weights, resident across the whole grid.
            pl.BlockSpec((Hp, 4 * Hp), lambda s, ids: (0, 0)),
        ],
        out_specs=pl.BlockSpec((None, T, Hp), lambda s, ids: (s, 0, 0)),
        scratch_shapes=[
            pltpu.VMEM((Vp, Hp), jnp.float32),                       # word-memory table
        ],
    )

    itemsize = jnp.dtype(compute_dtype).itemsize
    working_set = (
        Vp * Hp * 4                        # word-memory table (f32 scratch)
        + 2 * Hp * 4 * Hp * itemsize       # resident W_hh^T (+ double-buffer slack)
        + 2 * T * 4 * Hp * itemsize        # double-buffered xW sentence tiles
        + 2 * T * Hp * 4                   # double-buffered output tiles
    )
    vmem_limit = int(min(max(working_set + (8 << 20), 32 << 20), 100 << 20))

    cost = pl.CostEstimate(
        flops=2 * B * T * Hp * 4 * Hp,                               # recurrent matvecs
        transcendentals=5 * B * T * Hp,                              # tanh(3Hp)+tanh(Hp)+tanh(Hp)
        bytes_accessed=(B * T * 4 * Hp * itemsize + B * T * Hp * 4
                        + Hp * 4 * Hp * itemsize + 4 * B * T),
    )

    out = pl.pallas_call(
        functools.partial(memory_lstm_kernel,
                          hidden_size=H, memory_size=M, words_per_group=G),
        out_shape=jax.ShapeDtypeStruct((B, T, Hp), jnp.float32),
        grid_spec=grid_spec,
        compiler_params=pltpu.CompilerParams(
            dimension_semantics=("arbitrary",),                      # shared memory table => serial
            vmem_limit_bytes=vmem_limit),
        cost_estimate=cost,
    )(ids_flat, xw, whh_t)

    out = out[:, :, :H]                                              # drop lane padding
    hidden_states = jnp.transpose(out, (1, 0, 2))                    # (T, B, H)
    last_hidden = out[:, -1, :]                                      # (B, H)
    return hidden_states, last_hidden


def reference_forward(x, token_ids, w_ih, w_hh, b_ih, b_hh, memory_size, vocab_size):
    """Pure-numpy replica of MemoryLSTM.memory_rnn_pass (forward pass, hidden=None)."""
    x = np.asarray(x, np.float64)
    ids = np.asarray(token_ids)
    w_ih = np.asarray(w_ih, np.float64)
    w_hh = np.asarray(w_hh, np.float64)
    b = np.asarray(b_ih, np.float64) + np.asarray(b_hh, np.float64)
    T, B, I = x.shape
    H = w_hh.shape[1]
    M = memory_size
    sig = lambda v: 1.0 / (1.0 + np.exp(-v))

    mem = np.zeros((vocab_size, M))
    out = np.zeros((T, B, H))
    last = np.zeros((B, H))
    for s in range(B):
        h = np.zeros(H)
        c = np.zeros(H)
        for w in range(T):
            tid = int(ids[s, w])
            c = np.concatenate([c[: H - M], mem[tid]])
            gates = w_ih @ x[w, s] + w_hh @ h + b
            i_g = sig(gates[0 * H:1 * H])
            f_g = sig(gates[1 * H:2 * H])
            g_g = np.tanh(gates[2 * H:3 * H])
            o_g = sig(gates[3 * H:4 * H])
            c = f_g * c + i_g * g_g
            h = o_g * np.tanh(c)
            mem[tid] = c[H - M:]
            out[w, s] = h
        last[s] = h
    return out, last


if __name__ == "__main__":
    # Small shapes consistent with the module: input_size=16, hidden_size=32, memory_size=8,
    # batch=2 sentences, seq=8 words, vocabulary of 6 distinct tokens (repeats exercise memory).
    T, B, I, H, M, V = 8, 2, 16, 32, 8, 6

    key = jax.random.PRNGKey(0)
    kx, kid, k1, k2, k3, k4 = jax.random.split(key, 6)

    x = jax.random.normal(kx, (T, B, I), dtype=jnp.float32)
    token_ids = jax.random.randint(kid, (B, T), 0, V, dtype=jnp.int32)

    # Deterministic LSTMCell params (PyTorch-style U(-1/sqrt(H), 1/sqrt(H))).
    bound = 1.0 / np.sqrt(H)
    w_ih = jax.random.uniform(k1, (4 * H, I), jnp.float32, -bound, bound)
    w_hh = jax.random.uniform(k2, (4 * H, H), jnp.float32, -bound, bound)
    b_ih = jax.random.uniform(k3, (4 * H,), jnp.float32, -bound, bound)
    b_hh = jax.random.uniform(k4, (4 * H,), jnp.float32, -bound, bound)

    ref_out, ref_last = reference_forward(
        np.asarray(x), np.asarray(token_ids), np.asarray(w_ih), np.asarray(w_hh),
        np.asarray(b_ih), np.asarray(b_hh), memory_size=M, vocab_size=V)

    # Full-precision path: tight numerical check against the reference.
    hs32, last32 = memory_lstm_forward(
        x, token_ids, w_ih, w_hh, b_ih, b_hh, memory_size=M, vocab_size=V,
        compute_dtype=jnp.float32)
    jax.block_until_ready((hs32, last32))
    np.testing.assert_allclose(np.asarray(hs32), ref_out, rtol=2e-5, atol=2e-5)
    np.testing.assert_allclose(np.asarray(last32), ref_last, rtol=2e-5, atol=2e-5)

    # bf16 xW / W_hh path (default perf configuration): loose check.
    hs16, last16 = memory_lstm_forward(
        x, token_ids, w_ih, w_hh, b_ih, b_hh, memory_size=M, vocab_size=V,
        compute_dtype=jnp.bfloat16)
    jax.block_until_ready((hs16, last16))
    np.testing.assert_allclose(np.asarray(hs16), ref_out, rtol=5e-2, atol=5e-2)
    np.testing.assert_allclose(np.asarray(last16), ref_last, rtol=5e-2, atol=5e-2)

    # TODO(synk): bidirectional=True branch (second LSTMCell run in reverse), memory
    # persistence across separate forward calls (train/eval store copying), and the
    # string-keyed python dict (modeled as an integer-id-indexed VMEM table) are not implemented.
    print("KERNEL_OK")
</pallas_src>

<mosaic_0001>
module attributes {stable_mosaic.version = 11 : i64} {
  func.func @memory_lstm_kernel(%arg0: i32, %arg1: memref<16xi32, #tpu.memory_space<smem>>, %arg2: memref<1x8x512xf32, #tpu.memory_space<vmem>>, %arg3: memref<128x512xf32, #tpu.memory_space<vmem>>, %arg4: memref<1x8x128xf32, #tpu.memory_space<vmem>>, %arg5: memref<8x128xf32, #tpu.memory_space<vmem>>) attributes {dimension_semantics = [#tpu.dimension_semantics<arbitrary>], iteration_bounds = array<i64: 2>, scalar_prefetch = 1 : i64, scratch_operands = 1 : i64, tpu.core_type = #tpu.core_type<tc>, window_params = [{transform_indices = @transform_0, window_bounds = array<i64: 1, 8, 512>}, {pipeline_mode = #tpu.pipeline_mode<synchronous>, transform_indices = @transform_1, window_bounds = array<i64: 128, 512>}, {transform_indices = @transform_2, window_bounds = array<i64: 1, 8, 128>}]} {
    %c0_i32 = arith.constant 0 : i32
    %0 = arith.cmpi eq, %arg0, %c0_i32 : i32
    %1 = arith.extui %0 : i1 to i32
    %c0_i32_0 = arith.constant 0 : i32
    %2 = arith.cmpi ne, %1, %c0_i32_0 : i32
    scf.if %2 {
      %cst_80 = arith.constant 0.000000e+00 : f32
      %277 = vector.broadcast %cst_80 : f32 to vector<8x128xf32>
      %c0_81 = arith.constant 0 : index
      %c0_82 = arith.constant 0 : index
      %278 = vector.load %arg5[%c0_81, %c0_82] : memref<8x128xf32, #tpu.memory_space<vmem>>, vector<8x128xf32>
      tpu.vector_store %arg5[%c0_81, %c0_82], %277 {strides = array<i32>} : memref<8x128xf32, #tpu.memory_space<vmem>>, vector<8x128xf32>,
    } else {
    }
    %3 = tpu.iota {dimensions = array<i32: 1>} : vector<1x128xi32>
    %c24_i32 = arith.constant 24 : i32
    %4 = vector.broadcast %c24_i32 : i32 to vector<1x128xi32>
    %5 = arith.cmpi sge, %3, %4 : vector<1x128xi32>
    %c32_i32 = arith.constant 32 : i32
    %6 = vector.broadcast %c32_i32 : i32 to vector<1x128xi32>
    %7 = arith.cmpi slt, %3, %6 : vector<1x128xi32>
    %8 = arith.andi %5, %7 : vector<1x128xi1>
    %cst = arith.constant 0.000000e+00 : f32
    %9 = vector.broadcast %cst : f32 to vector<1x128xf32>
    %cst_1 = arith.constant 0.000000e+00 : f32
    %10 = vector.broadcast %cst_1 : f32 to vector<1x128xf32>
    %c0_i32_2 = arith.constant 0 : i32
    %c8_i32 = arith.constant 8 : i32
    %11 = arith.muli %c0_i32_2, %c8_i32 : i32
    %12 = tpu.assume_multiple %11, 8 : i32
    %c0 = arith.constant 0 : index
    %13 = arith.index_cast %12 : i32 to index
    %c0_3 = arith.constant 0 : index
    %14 = vector.load %arg2[%c0, %13, %c0_3] : memref<1x8x512xf32, #tpu.memory_space<vmem>>, vector<1x8x512xf32>
    %15 = vector.shape_cast %14 : vector<1x8x512xf32> to vector<8x512xf32>
    %c8_i32_4 = arith.constant 8 : i32
    %16 = arith.muli %arg0, %c8_i32_4 : i32
    %17 = arith.addi %16, %12 : i32
    %c0_i32_5 = arith.constant 0 : i32
    %18 = arith.addi %17, %c0_i32_5 : i32
    %19 = arith.index_cast %18 : i32 to index
    %20 = memref.load %arg1[%19] : memref<16xi32, #tpu.memory_space<smem>>
    %21 = arith.index_cast %20 : i32 to index
    %c0_6 = arith.constant 0 : index
    %22 = vector.load %arg5[%21, %c0_6] : memref<8x128xf32, #tpu.memory_space<vmem>>, vector<1x128xf32>
    %23 = arith.select %8, %22, %10 : vector<1x128xi1>, vector<1x128xf32>
    %24 = vector.extract_strided_slice %15 {offsets = [0, 0], sizes = [1, 512], strides = [1, 1]} : vector<8x512xf32> to vector<1x512xf32>
    %c0_7 = arith.constant 0 : index
    %c0_8 = arith.constant 0 : index
    %25 = vector.load %arg3[%c0_7, %c0_8] : memref<128x512xf32, #tpu.memory_space<vmem>>, vector<128x512xf32>
    %cst_9 = arith.constant dense<0.000000e+00> : vector<1x512xf32>
    %26 = tpu.matmul %9, %25, %cst_9 {dimension_numbers = #tpu.dot_dimension_numbers<[1], [0], [0], [1], [0, 0, 1, 1], [], []>} : vector<1x128xf32>, vector<128x512xf32>, vector<1x512xf32> -> vector<1x512xf32>
    %27 = arith.addf %24, %26 : vector<1x512xf32>
    %28 = vector.extract_strided_slice %27 {offsets = [0, 0], sizes = [1, 384], strides = [1, 1]} : vector<1x512xf32> to vector<1x384xf32>
    %cst_10 = arith.constant 5.000000e-01 : f32
    %29 = vector.broadcast %cst_10 : f32 to vector<1x384xf32>
    %30 = arith.mulf %29, %28 : vector<1x384xf32>
    %31 = math.tanh %30 : vector<1x384xf32>
    %cst_11 = arith.constant 5.000000e-01 : f32
    %32 = vector.broadcast %cst_11 : f32 to vector<1x384xf32>
    %33 = arith.mulf %32, %31 : vector<1x384xf32>
    %cst_12 = arith.constant 5.000000e-01 : f32
    %34 = vector.broadcast %cst_12 : f32 to vector<1x384xf32>
    %35 = arith.addf %33, %34 : vector<1x384xf32>
    %36 = vector.extract_strided_slice %35 {offsets = [0, 0], sizes = [1, 128], strides = [1, 1]} : vector<1x384xf32> to vector<1x128xf32>
    %37 = vector.extract_strided_slice %35 {offsets = [0, 128], sizes = [1, 128], strides = [1, 1]} : vector<1x384xf32> to vector<1x128xf32>
    %38 = vector.extract_strided_slice %35 {offsets = [0, 256], sizes = [1, 128], strides = [1, 1]} : vector<1x384xf32> to vector<1x128xf32>
    %39 = vector.extract_strided_slice %27 {offsets = [0, 384], sizes = [1, 128], strides = [1, 1]} : vector<1x512xf32> to vector<1x128xf32>
    %40 = math.tanh %39 : vector<1x128xf32>
    %41 = arith.mulf %37, %23 : vector<1x128xf32>
    %42 = arith.mulf %36, %40 : vector<1x128xf32>
    %43 = arith.addf %41, %42 : vector<1x128xf32>
    %44 = math.tanh %43 : vector<1x128xf32>
    %45 = arith.mulf %38, %44 : vector<1x128xf32>
    %46 = arith.index_cast %20 : i32 to index
    %c0_13 = arith.constant 0 : index
    %47 = vector.load %arg5[%46, %c0_13] : memref<8x128xf32, #tpu.memory_space<vmem>>, vector<1x128xf32>
    tpu.vector_store %arg5[%46, %c0_13], %43 {strides = array<i32>} : memref<8x128xf32, #tpu.memory_space<vmem>>, vector<1x128xf32>,
    %c8_i32_14 = arith.constant 8 : i32
    %48 = arith.muli %arg0, %c8_i32_14 : i32
    %49 = arith.addi %48, %12 : i32
    %c1_i32 = arith.constant 1 : i32
    %50 = arith.addi %49, %c1_i32 : i32
    %51 = arith.index_cast %50 : i32 to index
    %52 = memref.load %arg1[%51] : memref<16xi32, #tpu.memory_space<smem>>
    %53 = arith.index_cast %52 : i32 to index
    %c0_15 = arith.constant 0 : index
    %54 = vector.load %arg5[%53, %c0_15] : memref<8x128xf32, #tpu.memory_space<vmem>>, vector<1x128xf32>
    %55 = arith.select %8, %54, %43 : vector<1x128xi1>, vector<1x128xf32>
    %56 = vector.extract_strided_slice %15 {offsets = [1, 0], sizes = [1, 512], strides = [1, 1]} : vector<8x512xf32> to vector<1x512xf32>
    %c0_16 = arith.constant 0 : index
    %c0_17 = arith.constant 0 : index
    %57 = vector.load %arg3[%c0_16, %c0_17] : memref<128x512xf32, #tpu.memory_space<vmem>>, vector<128x512xf32>
    %cst_18 = arith.constant dense<0.000000e+00> : vector<1x512xf32>
    %58 = tpu.matmul %45, %57, %cst_18 {dimension_numbers = #tpu.dot_dimension_numbers<[1], [0], [0], [1], [0, 0, 1, 1], [], []>} : vector<1x128xf32>, vector<128x512xf32>, vector<1x512xf32> -> vector<1x512xf32>
    %59 = arith.addf %56, %58 : vector<1x512xf32>
    %60 = vector.extract_strided_slice %59 {offsets = [0, 0], sizes = [1, 384], strides = [1, 1]} : vector<1x512xf32> to vector<1x384xf32>
    %cst_19 = arith.constant 5.000000e-01 : f32
    %61 = vector.broadcast %cst_19 : f32 to vector<1x384xf32>
    %62 = arith.mulf %61, %60 : vector<1x384xf32>
    %63 = math.tanh %62 : vector<1x384xf32>
    %cst_20 = arith.constant 5.000000e-01 : f32
    %64 = vector.broadcast %cst_20 : f32 to vector<1x384xf32>
    %65 = arith.mulf %64, %63 : vector<1x384xf32>
    %cst_21 = arith.constant 5.000000e-01 : f32
    %66 = vector.broadcast %cst_21 : f32 to vector<1x384xf32>
    %67 = arith.addf %65, %66 : vector<1x384xf32>
    %68 = vector.extract_strided_slice %67 {offsets = [0, 0], sizes = [1, 128], strides = [1, 1]} : vector<1x384xf32> to vector<1x128xf32>
    %69 = vector.extract_strided_slice %67 {offsets = [0, 128], sizes = [1, 128], strides = [1, 1]} : vector<1x384xf32> to vector<1x128xf32>
    %70 = vector.extract_strided_slice %67 {offsets = [0, 256], sizes = [1, 128], strides = [1, 1]} : vector<1x384xf32> to vector<1x128xf32>
    %71 = vector.extract_strided_slice %59 {offsets = [0, 384], sizes = [1, 128], strides = [1, 1]} : vector<1x512xf32> to vector<1x128xf32>
    %72 = math.tanh %71 : vector<1x128xf32>
    %73 = arith.mulf %69, %55 : vector<1x128xf32>
    %74 = arith.mulf %68, %72 : vector<1x128xf32>
    %75 = arith.addf %73, %74 : vector<1x128xf32>
    %76 = math.tanh %75 : vector<1x128xf32>
    %77 = arith.mulf %70, %76 : vector<1x128xf32>
    %78 = arith.index_cast %52 : i32 to index
    %c0_22 = arith.constant 0 : index
    %79 = vector.load %arg5[%78, %c0_22] : memref<8x128xf32, #tpu.memory_space<vmem>>, vector<1x128xf32>
    tpu.vector_store %arg5[%78, %c0_22], %75 {strides = array<i32>} : memref<8x128xf32, #tpu.memory_space<vmem>>, vector<1x128xf32>,
    %c8_i32_23 = arith.constant 8 : i32
    %80 = arith.muli %arg0, %c8_i32_23 : i32
    %81 = arith.addi %80, %12 : i32
    %c2_i32 = arith.constant 2 : i32
    %82 = arith.addi %81, %c2_i32 : i32
    %83 = arith.index_cast %82 : i32 to index
    %84 = memref.load %arg1[%83] : memref<16xi32, #tpu.memory_space<smem>>
    %85 = arith.index_cast %84 : i32 to index
    %c0_24 = arith.constant 0 : index
    %86 = vector.load %arg5[%85, %c0_24] : memref<8x128xf32, #tpu.memory_space<vmem>>, vector<1x128xf32>
    %87 = arith.select %8, %86, %75 : vector<1x128xi1>, vector<1x128xf32>
    %88 = vector.extract_strided_slice %15 {offsets = [2, 0], sizes = [1, 512], strides = [1, 1]} : vector<8x512xf32> to vector<1x512xf32>
    %c0_25 = arith.constant 0 : index
    %c0_26 = arith.constant 0 : index
    %89 = vector.load %arg3[%c0_25, %c0_26] : memref<128x512xf32, #tpu.memory_space<vmem>>, vector<128x512xf32>
    %cst_27 = arith.constant dense<0.000000e+00> : vector<1x512xf32>
    %90 = tpu.matmul %77, %89, %cst_27 {dimension_numbers = #tpu.dot_dimension_numbers<[1], [0], [0], [1], [0, 0, 1, 1], [], []>} : vector<1x128xf32>, vector<128x512xf32>, vector<1x512xf32> -> vector<1x512xf32>
    %91 = arith.addf %88, %90 : vector<1x512xf32>
    %92 = vector.extract_strided_slice %91 {offsets = [0, 0], sizes = [1, 384], strides = [1, 1]} : vector<1x512xf32> to vector<1x384xf32>
    %cst_28 = arith.constant 5.000000e-01 : f32
    %93 = vector.broadcast %cst_28 : f32 to vector<1x384xf32>
    %94 = arith.mulf %93, %92 : vector<1x384xf32>
    %95 = math.tanh %94 : vector<1x384xf32>
    %cst_29 = arith.constant 5.000000e-01 : f32
    %96 = vector.broadcast %cst_29 : f32 to vector<1x384xf32>
    %97 = arith.mulf %96, %95 : vector<1x384xf32>
    %cst_30 = arith.constant 5.000000e-01 : f32
    %98 = vector.broadcast %cst_30 : f32 to vector<1x384xf32>
    %99 = arith.addf %97, %98 : vector<1x384xf32>
    %100 = vector.extract_strided_slice %99 {offsets = [0, 0], sizes = [1, 128], strides = [1, 1]} : vector<1x384xf32> to vector<1x128xf32>
    %101 = vector.extract_strided_slice %99 {offsets = [0, 128], sizes = [1, 128], strides = [1, 1]} : vector<1x384xf32> to vector<1x128xf32>
    %102 = vector.extract_strided_slice %99 {offsets = [0, 256], sizes = [1, 128], strides = [1, 1]} : vector<1x384xf32> to vector<1x128xf32>
    %103 = vector.extract_strided_slice %91 {offsets = [0, 384], sizes = [1, 128], strides = [1, 1]} : vector<1x512xf32> to vector<1x128xf32>
    %104 = math.tanh %103 : vector<1x128xf32>
    %105 = arith.mulf %101, %87 : vector<1x128xf32>
    %106 = arith.mulf %100, %104 : vector<1x128xf32>
    %107 = arith.addf %105, %106 : vector<1x128xf32>
    %108 = math.tanh %107 : vector<1x128xf32>
    %109 = arith.mulf %102, %108 : vector<1x128xf32>
    %110 = arith.index_cast %84 : i32 to index
    %c0_31 = arith.constant 0 : index
    %111 = vector.load %arg5[%110, %c0_31] : memref<8x128xf32, #tpu.memory_space<vmem>>, vector<1x128xf32>
    tpu.vector_store %arg5[%110, %c0_31], %107 {strides = array<i32>} : memref<8x128xf32, #tpu.memory_space<vmem>>, vector<1x128xf32>,
    %c8_i32_32 = arith.constant 8 : i32
    %112 = arith.muli %arg0, %c8_i32_32 : i32
    %113 = arith.addi %112, %12 : i32
    %c3_i32 = arith.constant 3 : i32
    %114 = arith.addi %113, %c3_i32 : i32
    %115 = arith.index_cast %114 : i32 to index
    %116 = memref.load %arg1[%115] : memref<16xi32, #tpu.memory_space<smem>>
    %117 = arith.index_cast %116 : i32 to index
    %c0_33 = arith.constant 0 : index
    %118 = vector.load %arg5[%117, %c0_33] : memref<8x128xf32, #tpu.memory_space<vmem>>, vector<1x128xf32>
    %119 = arith.select %8, %118, %107 : vector<1x128xi1>, vector<1x128xf32>
    %120 = vector.extract_strided_slice %15 {offsets = [3, 0], sizes = [1, 512], strides = [1, 1]} : vector<8x512xf32> to vector<1x512xf32>
    %c0_34 = arith.constant 0 : index
    %c0_35 = arith.constant 0 : index
    %121 = vector.load %arg3[%c0_34, %c0_35] : memref<128x512xf32, #tpu.memory_space<vmem>>, vector<128x512xf32>
    %cst_36 = arith.constant dense<0.000000e+00> : vector<1x512xf32>
    %122 = tpu.matmul %109, %121, %cst_36 {dimension_numbers = #tpu.dot_dimension_numbers<[1], [0], [0], [1], [0, 0, 1, 1], [], []>} : vector<1x128xf32>, vector<128x512xf32>, vector<1x512xf32> -> vector<1x512xf32>
    %123 = arith.addf %120, %122 : vector<1x512xf32>
    %124 = vector.extract_strided_slice %123 {offsets = [0, 0], sizes = [1, 384], strides = [1, 1]} : vector<1x512xf32> to vector<1x384xf32>
    %cst_37 = arith.constant 5.000000e-01 : f32
    %125 = vector.broadcast %cst_37 : f32 to vector<1x384xf32>
    %126 = arith.mulf %125, %124 : vector<1x384xf32>
    %127 = math.tanh %126 : vector<1x384xf32>
    %cst_38 = arith.constant 5.000000e-01 : f32
    %128 = vector.broadcast %cst_38 : f32 to vector<1x384xf32>
    %129 = arith.mulf %128, %127 : vector<1x384xf32>
    %cst_39 = arith.constant 5.000000e-01 : f32
    %130 = vector.broadcast %cst_39 : f32 to vector<1x384xf32>
    %131 = arith.addf %129, %130 : vector<1x384xf32>
    %132 = vector.extract_strided_slice %131 {offsets = [0, 0], sizes = [1, 128], strides = [1, 1]} : vector<1x384xf32> to vector<1x128xf32>
    %133 = vector.extract_strided_slice %131 {offsets = [0, 128], sizes = [1, 128], strides = [1, 1]} : vector<1x384xf32> to vector<1x128xf32>
    %134 = vector.extract_strided_slice %131 {offsets = [0, 256], sizes = [1, 128], strides = [1, 1]} : vector<1x384xf32> to vector<1x128xf32>
    %135 = vector.extract_strided_slice %123 {offsets = [0, 384], sizes = [1, 128], strides = [1, 1]} : vector<1x512xf32> to vector<1x128xf32>
    %136 = math.tanh %135 : vector<1x128xf32>
    %137 = arith.mulf %133, %119 : vector<1x128xf32>
    %138 = arith.mulf %132, %136 : vector<1x128xf32>
    %139 = arith.addf %137, %138 : vector<1x128xf32>
    %140 = math.tanh %139 : vector<1x128xf32>
    %141 = arith.mulf %134, %140 : vector<1x128xf32>
    %142 = arith.index_cast %116 : i32 to index
    %c0_40 = arith.constant 0 : index
    %143 = vector.load %arg5[%142, %c0_40] : memref<8x128xf32, #tpu.memory_space<vmem>>, vector<1x128xf32>
    tpu.vector_store %arg5[%142, %c0_40], %139 {strides = array<i32>} : memref<8x128xf32, #tpu.memory_space<vmem>>, vector<1x128xf32>,
    %c8_i32_41 = arith.constant 8 : i32
    %144 = arith.muli %arg0, %c8_i32_41 : i32
    %145 = arith.addi %144, %12 : i32
    %c4_i32 = arith.constant 4 : i32
    %146 = arith.addi %145, %c4_i32 : i32
    %147 = arith.index_cast %146 : i32 to index
    %148 = memref.load %arg1[%147] : memref<16xi32, #tpu.memory_space<smem>>
    %149 = arith.index_cast %148 : i32 to index
    %c0_42 = arith.constant 0 : index
    %150 = vector.load %arg5[%149, %c0_42] : memref<8x128xf32, #tpu.memory_space<vmem>>, vector<1x128xf32>
    %151 = arith.select %8, %150, %139 : vector<1x128xi1>, vector<1x128xf32>
    %152 = vector.extract_strided_slice %15 {offsets = [4, 0], sizes = [1, 512], strides = [1, 1]} : vector<8x512xf32> to vector<1x512xf32>
    %c0_43 = arith.constant 0 : index
    %c0_44 = arith.constant 0 : index
    %153 = vector.load %arg3[%c0_43, %c0_44] : memref<128x512xf32, #tpu.memory_space<vmem>>, vector<128x512xf32>
    %cst_45 = arith.constant dense<0.000000e+00> : vector<1x512xf32>
    %154 = tpu.matmul %141, %153, %cst_45 {dimension_numbers = #tpu.dot_dimension_numbers<[1], [0], [0], [1], [0, 0, 1, 1], [], []>} : vector<1x128xf32>, vector<128x512xf32>, vector<1x512xf32> -> vector<1x512xf32>
    %155 = arith.addf %152, %154 : vector<1x512xf32>
    %156 = vector.extract_strided_slice %155 {offsets = [0, 0], sizes = [1, 384], strides = [1, 1]} : vector<1x512xf32> to vector<1x384xf32>
    %cst_46 = arith.constant 5.000000e-01 : f32
    %157 = vector.broadcast %cst_46 : f32 to vector<1x384xf32>
    %158 = arith.mulf %157, %156 : vector<1x384xf32>
    %159 = math.tanh %158 : vector<1x384xf32>
    %cst_47 = arith.constant 5.000000e-01 : f32
    %160 = vector.broadcast %cst_47 : f32 to vector<1x384xf32>
    %161 = arith.mulf %160, %159 : vector<1x384xf32>
    %cst_48 = arith.constant 5.000000e-01 : f32
    %162 = vector.broadcast %cst_48 : f32 to vector<1x384xf32>
    %163 = arith.addf %161, %162 : vector<1x384xf32>
    %164 = vector.extract_strided_slice %163 {offsets = [0, 0], sizes = [1, 128], strides = [1, 1]} : vector<1x384xf32> to vector<1x128xf32>
    %165 = vector.extract_strided_slice %163 {offsets = [0, 128], sizes = [1, 128], strides = [1, 1]} : vector<1x384xf32> to vector<1x128xf32>
    %166 = vector.extract_strided_slice %163 {offsets = [0, 256], sizes = [1, 128], strides = [1, 1]} : vector<1x384xf32> to vector<1x128xf32>
    %167 = vector.extract_strided_slice %155 {offsets = [0, 384], sizes = [1, 128], strides = [1, 1]} : vector<1x512xf32> to vector<1x128xf32>
    %168 = math.tanh %167 : vector<1x128xf32>
    %169 = arith.mulf %165, %151 : vector<1x128xf32>
    %170 = arith.mulf %164, %168 : vector<1x128xf32>
    %171 = arith.addf %169, %170 : vector<1x128xf32>
    %172 = math.tanh %171 : vector<1x128xf32>
    %173 = arith.mulf %166, %172 : vector<1x128xf32>
    %174 = arith.index_cast %148 : i32 to index
    %c0_49 = arith.constant 0 : index
    %175 = vector.load %arg5[%174, %c0_49] : memref<8x128xf32, #tpu.memory_space<vmem>>, vector<1x128xf32>
    tpu.vector_store %arg5[%174, %c0_49], %171 {strides = array<i32>} : memref<8x128xf32, #tpu.memory_space<vmem>>, vector<1x128xf32>,
    %c8_i32_50 = arith.constant 8 : i32
    %176 = arith.muli %arg0, %c8_i32_50 : i32
    %177 = arith.addi %176, %12 : i32
    %c5_i32 = arith.constant 5 : i32
    %178 = arith.addi %177, %c5_i32 : i32
    %179 = arith.index_cast %178 : i32 to index
    %180 = memref.load %arg1[%179] : memref<16xi32, #tpu.memory_space<smem>>
    %181 = arith.index_cast %180 : i32 to index
    %c0_51 = arith.constant 0 : index
    %182 = vector.load %arg5[%181, %c0_51] : memref<8x128xf32, #tpu.memory_space<vmem>>, vector<1x128xf32>
    %183 = arith.select %8, %182, %171 : vector<1x128xi1>, vector<1x128xf32>
    %184 = vector.extract_strided_slice %15 {offsets = [5, 0], sizes = [1, 512], strides = [1, 1]} : vector<8x512xf32> to vector<1x512xf32>
    %c0_52 = arith.constant 0 : index
    %c0_53 = arith.constant 0 : index
    %185 = vector.load %arg3[%c0_52, %c0_53] : memref<128x512xf32, #tpu.memory_space<vmem>>, vector<128x512xf32>
    %cst_54 = arith.constant dense<0.000000e+00> : vector<1x512xf32>
    %186 = tpu.matmul %173, %185, %cst_54 {dimension_numbers = #tpu.dot_dimension_numbers<[1], [0], [0], [1], [0, 0, 1, 1], [], []>} : vector<1x128xf32>, vector<128x512xf32>, vector<1x512xf32> -> vector<1x512xf32>
    %187 = arith.addf %184, %186 : vector<1x512xf32>
    %188 = vector.extract_strided_slice %187 {offsets = [0, 0], sizes = [1, 384], strides = [1, 1]} : vector<1x512xf32> to vector<1x384xf32>
    %cst_55 = arith.constant 5.000000e-01 : f32
    %189 = vector.broadcast %cst_55 : f32 to vector<1x384xf32>
    %190 = arith.mulf %189, %188 : vector<1x384xf32>
    %191 = math.tanh %190 : vector<1x384xf32>
    %cst_56 = arith.constant 5.000000e-01 : f32
    %192 = vector.broadcast %cst_56 : f32 to vector<1x384xf32>
    %193 = arith.mulf %192, %191 : vector<1x384xf32>
    %cst_57 = arith.constant 5.000000e-01 : f32
    %194 = vector.broadcast %cst_57 : f32 to vector<1x384xf32>
    %195 = arith.addf %193, %194 : vector<1x384xf32>
    %196 = vector.extract_strided_slice %195 {offsets = [0, 0], sizes = [1, 128], strides = [1, 1]} : vector<1x384xf32> to vector<1x128xf32>
    %197 = vector.extract_strided_slice %195 {offsets = [0, 128], sizes = [1, 128], strides = [1, 1]} : vector<1x384xf32> to vector<1x128xf32>
    %198 = vector.extract_strided_slice %195 {offsets = [0, 256], sizes = [1, 128], strides = [1, 1]} : vector<1x384xf32> to vector<1x128xf32>
    %199 = vector.extract_strided_slice %187 {offsets = [0, 384], sizes = [1, 128], strides = [1, 1]} : vector<1x512xf32> to vector<1x128xf32>
    %200 = math.tanh %199 : vector<1x128xf32>
    %201 = arith.mulf %197, %183 : vector<1x128xf32>
    %202 = arith.mulf %196, %200 : vector<1x128xf32>
    %203 = arith.addf %201, %202 : vector<1x128xf32>
    %204 = math.tanh %203 : vector<1x128xf32>
    %205 = arith.mulf %198, %204 : vector<1x128xf32>
    %206 = arith.index_cast %180 : i32 to index
    %c0_58 = arith.constant 0 : index
    %207 = vector.load %arg5[%206, %c0_58] : memref<8x128xf32, #tpu.memory_space<vmem>>, vector<1x128xf32>
    tpu.vector_store %arg5[%206, %c0_58], %203 {strides = array<i32>} : memref<8x128xf32, #tpu.memory_space<vmem>>, vector<1x128xf32>,
    %c8_i32_59 = arith.constant 8 : i32
    %208 = arith.muli %arg0, %c8_i32_59 : i32
    %209 = arith.addi %208, %12 : i32
    %c6_i32 = arith.constant 6 : i32
    %210 = arith.addi %209, %c6_i32 : i32
    %211 = arith.index_cast %210 : i32 to index
    %212 = memref.load %arg1[%211] : memref<16xi32, #tpu.memory_space<smem>>
    %213 = arith.index_cast %212 : i32 to index
    %c0_60 = arith.constant 0 : index
    %214 = vector.load %arg5[%213, %c0_60] : memref<8x128xf32, #tpu.memory_space<vmem>>, vector<1x128xf32>
    %215 = arith.select %8, %214, %203 : vector<1x128xi1>, vector<1x128xf32>
    %216 = vector.extract_strided_slice %15 {offsets = [6, 0], sizes = [1, 512], strides = [1, 1]} : vector<8x512xf32> to vector<1x512xf32>
    %c0_61 = arith.constant 0 : index
    %c0_62 = arith.constant 0 : index
    %217 = vector.load %arg3[%c0_61, %c0_62] : memref<128x512xf32, #tpu.memory_space<vmem>>, vector<128x512xf32>
    %cst_63 = arith.constant dense<0.000000e+00> : vector<1x512xf32>
    %218 = tpu.matmul %205, %217, %cst_63 {dimension_numbers = #tpu.dot_dimension_numbers<[1], [0], [0], [1], [0, 0, 1, 1], [], []>} : vector<1x128xf32>, vector<128x512xf32>, vector<1x512xf32> -> vector<1x512xf32>
    %219 = arith.addf %216, %218 : vector<1x512xf32>
    %220 = vector.extract_strided_slice %219 {offsets = [0, 0], sizes = [1, 384], strides = [1, 1]} : vector<1x512xf32> to vector<1x384xf32>
    %cst_64 = arith.constant 5.000000e-01 : f32
    %221 = vector.broadcast %cst_64 : f32 to vector<1x384xf32>
    %222 = arith.mulf %221, %220 : vector<1x384xf32>
    %223 = math.tanh %222 : vector<1x384xf32>
    %cst_65 = arith.constant 5.000000e-01 : f32
    %224 = vector.broadcast %cst_65 : f32 to vector<1x384xf32>
    %225 = arith.mulf %224, %223 : vector<1x384xf32>
    %cst_66 = arith.constant 5.000000e-01 : f32
    %226 = vector.broadcast %cst_66 : f32 to vector<1x384xf32>
    %227 = arith.addf %225, %226 : vector<1x384xf32>
    %228 = vector.extract_strided_slice %227 {offsets = [0, 0], sizes = [1, 128], strides = [1, 1]} : vector<1x384xf32> to vector<1x128xf32>
    %229 = vector.extract_strided_slice %227 {offsets = [0, 128], sizes = [1, 128], strides = [1, 1]} : vector<1x384xf32> to vector<1x128xf32>
    %230 = vector.extract_strided_slice %227 {offsets = [0, 256], sizes = [1, 128], strides = [1, 1]} : vector<1x384xf32> to vector<1x128xf32>
    %231 = vector.extract_strided_slice %219 {offsets = [0, 384], sizes = [1, 128], strides = [1, 1]} : vector<1x512xf32> to vector<1x128xf32>
    %232 = math.tanh %231 : vector<1x128xf32>
    %233 = arith.mulf %229, %215 : vector<1x128xf32>
    %234 = arith.mulf %228, %232 : vector<1x128xf32>
    %235 = arith.addf %233, %234 : vector<1x128xf32>
    %236 = math.tanh %235 : vector<1x128xf32>
    %237 = arith.mulf %230, %236 : vector<1x128xf32>
    %238 = arith.index_cast %212 : i32 to index
    %c0_67 = arith.constant 0 : index
    %239 = vector.load %arg5[%238, %c0_67] : memref<8x128xf32, #tpu.memory_space<vmem>>, vector<1x128xf32>
    tpu.vector_store %arg5[%238, %c0_67], %235 {strides = array<i32>} : memref<8x128xf32, #tpu.memory_space<vmem>>, vector<1x128xf32>,
    %c8_i32_68 = arith.constant 8 : i32
    %240 = arith.muli %arg0, %c8_i32_68 : i32
    %241 = arith.addi %240, %12 : i32
    %c7_i32 = arith.constant 7 : i32
    %242 = arith.addi %241, %c7_i32 : i32
    %243 = arith.index_cast %242 : i32 to index
    %244 = memref.load %arg1[%243] : memref<16xi32, #tpu.memory_space<smem>>
    %245 = arith.index_cast %244 : i32 to index
    %c0_69 = arith.constant 0 : index
    %246 = vector.load %arg5[%245, %c0_69] : memref<8x128xf32, #tpu.memory_space<vmem>>, vector<1x128xf32>
    %247 = arith.select %8, %246, %235 : vector<1x128xi1>, vector<1x128xf32>
    %248 = vector.extract_strided_slice %15 {offsets = [7, 0], sizes = [1, 512], strides = [1, 1]} : vector<8x512xf32> to vector<1x512xf32>
    %c0_70 = arith.constant 0 : index
    %c0_71 = arith.constant 0 : index
    %249 = vector.load %arg3[%c0_70, %c0_71] : memref<128x512xf32, #tpu.memory_space<vmem>>, vector<128x512xf32>
    %cst_72 = arith.constant dense<0.000000e+00> : vector<1x512xf32>
    %250 = tpu.matmul %237, %249, %cst_72 {dimension_numbers = #tpu.dot_dimension_numbers<[1], [0], [0], [1], [0, 0, 1, 1], [], []>} : vector<1x128xf32>, vector<128x512xf32>, vector<1x512xf32> -> vector<1x512xf32>
    %251 = arith.addf %248, %250 : vector<1x512xf32>
    %252 = vector.extract_strided_slice %251 {offsets = [0, 0], sizes = [1, 384], strides = [1, 1]} : vector<1x512xf32> to vector<1x384xf32>
    %cst_73 = arith.constant 5.000000e-01 : f32
    %253 = vector.broadcast %cst_73 : f32 to vector<1x384xf32>
    %254 = arith.mulf %253, %252 : vector<1x384xf32>
    %255 = math.tanh %254 : vector<1x384xf32>
    %cst_74 = arith.constant 5.000000e-01 : f32
    %256 = vector.broadcast %cst_74 : f32 to vector<1x384xf32>
    %257 = arith.mulf %256, %255 : vector<1x384xf32>
    %cst_75 = arith.constant 5.000000e-01 : f32
    %258 = vector.broadcast %cst_75 : f32 to vector<1x384xf32>
    %259 = arith.addf %257, %258 : vector<1x384xf32>
    %260 = vector.extract_strided_slice %259 {offsets = [0, 0], sizes = [1, 128], strides = [1, 1]} : vector<1x384xf32> to vector<1x128xf32>
    %261 = vector.extract_strided_slice %259 {offsets = [0, 128], sizes = [1, 128], strides = [1, 1]} : vector<1x384xf32> to vector<1x128xf32>
    %262 = vector.extract_strided_slice %259 {offsets = [0, 256], sizes = [1, 128], strides = [1, 1]} : vector<1x384xf32> to vector<1x128xf32>
    %263 = vector.extract_strided_slice %251 {offsets = [0, 384], sizes = [1, 128], strides = [1, 1]} : vector<1x512xf32> to vector<1x128xf32>
    %264 = math.tanh %263 : vector<1x128xf32>
    %265 = arith.mulf %261, %247 : vector<1x128xf32>
    %266 = arith.mulf %260, %264 : vector<1x128xf32>
    %267 = arith.addf %265, %266 : vector<1x128xf32>
    %268 = math.tanh %267 : vector<1x128xf32>
    %269 = arith.mulf %262, %268 : vector<1x128xf32>
    %270 = arith.index_cast %244 : i32 to index
    %c0_76 = arith.constant 0 : index
    %271 = vector.load %arg5[%270, %c0_76] : memref<8x128xf32, #tpu.memory_space<vmem>>, vector<1x128xf32>
    tpu.vector_store %arg5[%270, %c0_76], %267 {strides = array<i32>} : memref<8x128xf32, #tpu.memory_space<vmem>>, vector<1x128xf32>,
    %272 = tpu.concatenate %45, %77, %109, %141, %173, %205, %237, %269 in 0 : vector<1x128xf32>, vector<1x128xf32>, vector<1x128xf32>, vector<1x128xf32>, vector<1x128xf32>, vector<1x128xf32>, vector<1x128xf32>, vector<1x128xf32> -> vector<8x128xf32>
    %c0_77 = arith.constant 0 : index
    %273 = arith.index_cast %12 : i32 to index
    %c0_78 = arith.constant 0 : index
    %274 = vector.load %arg4[%c0_77, %273, %c0_78] : memref<1x8x128xf32, #tpu.memory_space<vmem>>, vector<1x8x128xf32>
    %275 = vector.shape_cast %274 : vector<1x8x128xf32> to vector<8x128xf32>
    %276 = vector.shape_cast %272 : vector<8x128xf32> to vector<1x8x128xf32>
    tpu.vector_store %arg4[%c0_77, %273, %c0_78], %276 {strides = array<i32>} : memref<1x8x128xf32, #tpu.memory_space<vmem>>, vector<1x8x128xf32>,
    %c1_i32_79 = arith.constant 1 : i32
    return
  }
  func.func @transform_0(%arg0: i32, %arg1: memref<16xi32, #tpu.memory_space<smem>>) -> (i32, i32, i32) {
    %c0_i32 = arith.constant 0 : i32
    %c0_i32_0 = arith.constant 0 : i32
    %c0_i32_1 = arith.constant 0 : i32
    return %arg0, %c0_i32, %c0_i32_0 : i32, i32, i32
  }
  func.func @transform_1(%arg0: i32, %arg1: memref<16xi32, #tpu.memory_space<smem>>) -> (i32, i32) {
    %c0_i32 = arith.constant 0 : i32
    %c0_i32_0 = arith.constant 0 : i32
    %c0_i32_1 = arith.constant 0 : i32
    return %c0_i32, %c0_i32_0 : i32, i32
  }
  func.func @transform_2(%arg0: i32, %arg1: memref<16xi32, #tpu.memory_space<smem>>) -> (i32, i32, i32) {
    %c0_i32 = arith.constant 0 : i32
    %c0_i32_0 = arith.constant 0 : i32
    %c0_i32_1 = arith.constant 0 : i32
    return %arg0, %c0_i32, %c0_i32_0 : i32, i32, i32
  }
}

</mosaic_0001>

<llo_original>
// kernel: tpu_custom_call.1
$region0: #{tpu_custom_call.1}
  #allocation0 [shape = 'u32[]', space=smem, size = 0x4, offset = 0x4, fixed_abs, tag = 'smem constant byte address 0x4 - core index']
  #allocation1 [shape = 'u32[144,128]{1,0:T(1,128)}', space=vmem, size = 0x12000, scoped, tag = 'internal scratch']
  #allocation2 [shape = 'f32[8,128]{1,0:T(8,128)}', space=vmem, size = 0x1000, scoped, tag = 'scratch operand']
  #allocation3 [shape = 's32[1]{0}', space=sflag, size = 0x4, scoped, tag = 'scoped memory for tpu_custom_call.1']
  #allocation4 [shape = 'u8[512]{0}', space=smem, size = 0x200, scoped, tag = 'prefetched SMEM operand 0']
  %s0 = inlined_call_operand.hbm [shape: s32[16], index: 0, kind: input, shape index: {}]
  %s1 = inlined_call_operand.hbm [shape: f32[2,8,512], index: 1, kind: input, shape index: {}]
  %s2 = inlined_call_operand.hbm [shape: f32[128,512], index: 2, kind: input, shape index: {}]
  %s3 = inlined_call_operand.hbm [shape: f32[2,8,128], index: 3, kind: output, shape index: {}]
  %s4 = sld [smem:[#allocation0]]
  $region53: #{tpu_custom_call.1} parent=0
    _
  %s6 = ssub.s32 1, %s4
  %s7 = scalar_select 0, %s6, %s4
  %9 = dma.hbm_to_smem %s0, 16, [#allocation4], [#allocation3]
  %10 = dma.done [#allocation3], 16
  %11 = sfence
  $region1: #{tpu_custom_call.1} parent=0
    #allocation5 [shape = 'u8[32768]{0}', space=vmem, size = 0x8000, scoped, tag = 'input window, operand 1']
    #allocation6 [shape = 's32[2]{0}', space=sflag, size = 0x8, scoped, tag = 'scoped memory for tpu_custom_call.1']
    #allocation7 [shape = 's32[2]{0}', space=sflag, size = 0x8, scoped, tag = 'scoped memory for tpu_custom_call.1']
    #allocation8 [shape = 'u8[262144]{0}', space=vmem, size = 0x40000, scoped, tag = 'input window, operand 2, single buffered']
    #allocation9 [shape = 's32[1]{0}', space=sflag, size = 0x4, scoped, tag = 'scoped memory for tpu_custom_call.1']
    #allocation10 [shape = 'u8[8192]{0}', space=vmem, size = 0x2000, scoped, tag = 'output window, operand 0']
    %12 = vsyncpa [#allocation6], 0
    %s13 = scalar_lea.sflag [#allocation6], 1
    %14 = vsyncpa %s13, 0
    %15 = vsyncpa [#allocation9], 0
    %16 = vsyncpa [#allocation7], 0
    %s17 = scalar_lea.sflag [#allocation7], 1
    %18 = vsyncpa %s17, 0
    loop: start=0, step=1, limit=4
    $region2: #{tpu_custom_call.1} parent=1 // loop_pre_header
      _
    $region3: #{tpu_custom_call.1} parent=1 // loop_header
      %s20 = sphi 0, %s24
      %p21 = scmp.ge.s32.totalorder %s20, 4
      %s30 = sphi 0, %s32
      %s33 = sphi 0, %s30
      %s34 = sphi 0, %s33
      %s50 = sphi 0, %s34
      %s54 = sphi 0, %s54
      %s56 = sphi 0, %s54
      %s57 = sphi 0, %s56
      %s71 = sphi 0, %s57
      %s77 = sphi 0, %s79
      %s80 = sphi 0, %s77
      %s81 = sphi 0, %s80
      %s97 = sphi 0, %s81
    $region4: #{tpu_custom_call.1} parent=1 // loop_header_branch
      %23 = sbr.rel (%p21) target = $region8
    $region5: #{tpu_custom_call.1} parent=1 // loop_body
      %s25 = ssub.s32 %s20, 1
      %s26 = ssub.s32 %s20, 2
      %s27 = sadd.s32 %s20, 1
      %s28 = ssub.s32 %s20, %s27
      %p29 = scmp.eq.s32.totalorder %s28, 0
      %s31 = sadd.s32 %s30, 1
      %s32 = scalar_select %p29, %s30, %s31
      %p35 = pneg %p29
      %p36 = scmp.eq.s32.totalorder %s20, 1
      %p37 = por %p35, %p36
      %p38 = scmp.ne.s32.totalorder %s30, %s33
      %p39 = scmp.eq.s32.totalorder %s20, 0
      %p40 = por %p38, %p39
      %p41 = scmp.ne.s32.totalorder %s30, %s33
      %p42 = scmp.eq.s32.totalorder %s25, 1
      %p43 = por %p41, %p42
      %p44 = scmp.ne.s32.totalorder %s33, %s34
      %p45 = scmp.eq.s32.totalorder %s25, 0
      %p46 = por %p44, %p45
      %p47 = scmp.ne.s32.totalorder %s33, %s34
      %p48 = scmp.eq.s32.totalorder %s26, 1
      %p49 = por %p47, %p48
      %p51 = scmp.ne.s32.totalorder %s34, %s50
      %p52 = scmp.eq.s32.totalorder %s26, 0
      %p53 = por %p51, %p52
      %s55 = sadd.s32 %s54, 1
      %p58 = scmp.eq.s32.totalorder %s20, 1
      %p59 = scmp.ne.s32.totalorder %s54, %s56
      %p60 = scmp.eq.s32.totalorder %s20, 0
      %p61 = por %p59, %p60
      %p62 = scmp.ne.s32.totalorder %s54, %s56
      %p63 = scmp.eq.s32.totalorder %s25, 1
      %p64 = por %p62, %p63
      %p65 = scmp.ne.s32.totalorder %s56, %s57
      %p66 = scmp.eq.s32.totalorder %s25, 0
      %p67 = por %p65, %p66
      %p68 = scmp.ne.s32.totalorder %s56, %s57
      %p69 = scmp.eq.s32.totalorder %s26, 1
      %p70 = por %p68, %p69
      %p72 = scmp.ne.s32.totalorder %s57, %s71
      %p73 = scmp.eq.s32.totalorder %s26, 0
      %p74 = por %p72, %p73
      %s75 = ssub.s32 %s20, %s27
      %p76 = scmp.eq.s32.totalorder %s75, 0
      %s78 = sadd.s32 %s77, 1
      %s79 = scalar_select %p76, %s77, %s78
      %p82 = pneg %p76
      %p83 = scmp.eq.s32.totalorder %s20, 1
      %p84 = por %p82, %p83
      %p85 = scmp.ne.s32.totalorder %s77, %s80
      %p86 = scmp.eq.s32.totalorder %s20, 0
      %p87 = por %p85, %p86
      %p88 = scmp.ne.s32.totalorder %s77, %s80
      %p89 = scmp.eq.s32.totalorder %s25, 1
      %p90 = por %p88, %p89
      %p91 = scmp.ne.s32.totalorder %s80, %s81
      %p92 = scmp.eq.s32.totalorder %s25, 0
      %p93 = por %p91, %p92
      %p94 = scmp.ne.s32.totalorder %s80, %s81
      %p95 = scmp.eq.s32.totalorder %s26, 1
      %p96 = por %p94, %p95
      %p98 = scmp.ne.s32.totalorder %s81, %s97
      %p99 = scmp.eq.s32.totalorder %s26, 0
      %p100 = por %p98, %p99
      %p101 = scmp.le.s32.totalorder 1, %s20
      %p102 = scmp.lt.s32.totalorder %s20, 3
      %p103 = pnand %p101, %p102
      %p104 = pneg %p103
      // Predicated region
      $region9: #{tpu_custom_call.1} parent=5 // pred_check
        _
      $region10: #{tpu_custom_call.1} parent=5 // pred_check_branch
        %106 = sbr.rel (%p103) target = $region12
      $region11: #{tpu_custom_call.1} parent=5 // pred_region
        %s107 = ssub.s32 %s20, 1
        // Predicated region
        $region13: #{tpu_custom_call.1} parent=11 // pred_check
          %p108 = pneg %p67
        $region14: #{tpu_custom_call.1} parent=11 // pred_check_branch
          %110 = sbr.rel (%p108) target = $region16
        $region15: #{tpu_custom_call.1} parent=11 // pred_region
          %s112 = ssub.s32 8192, 8192
          %113 = vsyncadd [#allocation9], %s112
          %s114 = sshll.u32 [#allocation8], 4
          %s115 = int_to_ptr.vmem [resolvable:$true] %s114
          %120 = dma.hbm_to_vmem [thread:$0]  %s2, 8192, %s115, [#allocation9], 512, 512, 32
        $region16: #{tpu_custom_call.1} parent=11 // pred_fallthru
          _
      $region12: #{tpu_custom_call.1} parent=5 // pred_fallthru
        _
      %p121 = scmp.lt.s32.totalorder %s20, 2
      // Predicated region
      $region17: #{tpu_custom_call.1} parent=5 // pred_check
        %p122 = pneg %p121
      $region18: #{tpu_custom_call.1} parent=5 // pred_check_branch
        %124 = sbr.rel (%p122) target = $region20
      $region19: #{tpu_custom_call.1} parent=5 // pred_region
        // Predicated region
        $region21: #{tpu_custom_call.1} parent=19 // pred_check
          %p125 = pneg %p40
        $region22: #{tpu_custom_call.1} parent=19 // pred_check_branch
          %127 = sbr.rel (%p125) target = $region24
        $region23: #{tpu_custom_call.1} parent=19 // pred_region
          %s128 = sand.u32 %s30, 1
          %s129 = scalar_lea.sflag [#allocation6], %s128
          %s130 = sand.u32 %s30, 1
          %s131 = smul.addr %s130, 32
          %s132 = scalar_lea.vmem [#allocation5], %s131
          %s134 = ssub.s32 512, 512
          %135 = vsyncadd %s129, %s134
          %s136 = smul.addr %s20, 4
          %s137 = smul.addr %s136, 128
          %s138 = scalar_lea.hbm %s1, %s137
          %s140 = sshll.u32 %s132, 4
          %s141 = int_to_ptr.vmem [resolvable:$true] %s140
          %143 = dma.hbm_to_vmem [thread:$0]  %s138, 512, %s141, %s129
        $region24: #{tpu_custom_call.1} parent=19 // pred_fallthru
          _
      $region20: #{tpu_custom_call.1} parent=5 // pred_fallthru
        _
      %p144 = scmp.le.s32.totalorder 1, %s20
      %p145 = scmp.lt.s32.totalorder %s20, 3
      %p146 = pnand %p144, %p145
      %p147 = pneg %p146
      // Predicated region
      $region25: #{tpu_custom_call.1} parent=5 // pred_check
        _
      $region26: #{tpu_custom_call.1} parent=5 // pred_check_branch
        %149 = sbr.rel (%p146) target = $region28
      $region27: #{tpu_custom_call.1} parent=5 // pred_region
        %s150 = ssub.s32 %s20, 1
        %s151 = sand.u32 %s33, 1
        %s152 = scalar_lea.sflag [#allocation6], %s151
        %s153 = sand.u32 %s33, 1
        %s154 = smul.addr %s153, 32
        %s155 = scalar_lea.vmem [#allocation5], %s154
        // Predicated region
        $region29: #{tpu_custom_call.1} parent=27 // pred_check
          %p156 = pneg %p46
        $region30: #{tpu_custom_call.1} parent=27 // pred_check_branch
          %158 = sbr.rel (%p156) target = $region32
        $region31: #{tpu_custom_call.1} parent=27 // pred_region
          %159 = dma.done %s152, 512
        $region32: #{tpu_custom_call.1} parent=27 // pred_fallthru
          _
        // Predicated region
        $region33: #{tpu_custom_call.1} parent=27 // pred_check
          %p160 = pneg %p67
        $region34: #{tpu_custom_call.1} parent=27 // pred_check_branch
          %162 = sbr.rel (%p160) target = $region36
        $region35: #{tpu_custom_call.1} parent=27 // pred_region
          %163 = dma.done [#allocation9], 8192
        $region36: #{tpu_custom_call.1} parent=27 // pred_fallthru
          _
        %s164 = sand.u32 %s33, 1
        %s165 = scalar_lea.sflag [#allocation6], %s164
        %s166 = sand.u32 %s33, 1
        %s167 = smul.addr %s166, 32
        %s168 = scalar_lea.vmem [#allocation5], %s167
        %p169 = pneg %p46
        %p170 = pneg %p43
        %p171 = pneg %p67
        %p172 = pneg %p64
        %p173 = pneg %p93
        %p174 = pneg %p90
        %s175 = sand.u32 %s80, 1
        %s176 = scalar_lea.sflag [#allocation7], %s175
        %s177 = sand.u32 %s80, 1
        %s178 = smul.addr %s177, 8
        %s179 = scalar_lea.vmem [#allocation10], %s178
        %p180 = scmp.eq.s32.totalorder %s25, 0
        // Predicated region
        $region37: #{tpu_custom_call.1} parent=27 // pred_check
          %p181 = pneg %p180
        $region38: #{tpu_custom_call.1} parent=27 // pred_check_branch
          %183 = sbr.rel (%p181) target = $region40
        $region39: #{tpu_custom_call.1} parent=27 // pred_region
          %184 = vst [vmem:[#allocation2] sm:$0xff] 0.0
        $region40: #{tpu_custom_call.1} parent=27 // pred_fallthru
          _
        %v185 = vlaneseq
        %v186 = vand.u32 %v185, 127
        %vm187 = vcmp.ge.s32.totalorder %v186, 24
        %vm188 = vcmp.lt.s32.totalorder %v186, 32
        %vm189 = vmand %vm187, %vm188
        %s190 = smul.u32 0, 4
        %s191 = smul.addr %s190, 8
        %s192 = scalar_lea.vmem %s155, %s191 [#allocation5]
        %v193 = vld [vmem:[%s192] sm:$0xff]
        %v194 = vld [vmem:[%s192 + $0x8] sm:$0xff]
        %v195 = vld [vmem:[%s192 + $0x10] sm:$0xff]
        %v196 = vld [vmem:[%s192 + $0x18] sm:$0xff]
        %s197 = smul.u32 %s25, 8
        %s198 = sadd.s32 %s197, 0
        %s199 = sld [smem:[#allocation4 + %s198]]
        %s200 = scalar_lea.vmem [#allocation2], %s199
        %v201 = vld [vmem:[%s200] sm:$0x1]
        %v202 = vsel %vm189, %v201, 0.0
        %v203 = vld [vmem:[#allocation8] sm:$0xff]
        %v204 = vld [vmem:[#allocation8 + $0x8] sm:$0xff]
        %v205 = vld [vmem:[#allocation8 + $0x10] sm:$0xff]
        %v206 = vld [vmem:[#allocation8 + $0x18] sm:$0xff]
        %v207 = vld [vmem:[#allocation8 + $0x20] sm:$0xff]
        %v208 = vld [vmem:[#allocation8 + $0x28] sm:$0xff]
        %v209 = vld [vmem:[#allocation8 + $0x30] sm:$0xff]
        %v210 = vld [vmem:[#allocation8 + $0x38] sm:$0xff]
        %v211 = vld [vmem:[#allocation8 + $0x40] sm:$0xff]
        %v212 = vld [vmem:[#allocation8 + $0x48] sm:$0xff]
        %v213 = vld [vmem:[#allocation8 + $0x50] sm:$0xff]
        %v214 = vld [vmem:[#allocation8 + $0x58] sm:$0xff]
        %v215 = vld [vmem:[#allocation8 + $0x60] sm:$0xff]
        %v216 = vld [vmem:[#allocation8 + $0x68] sm:$0xff]
        %v217 = vld [vmem:[#allocation8 + $0x70] sm:$0xff]
        %v218 = vld [vmem:[#allocation8 + $0x78] sm:$0xff]
        %v219 = vld [vmem:[#allocation8 + $0x80] sm:$0xff]
        %v220 = vld [vmem:[#allocation8 + $0x88] sm:$0xff]
        %v221 = vld [vmem:[#allocation8 + $0x90] sm:$0xff]
        %v222 = vld [vmem:[#allocation8 + $0x98] sm:$0xff]
        %v223 = vld [vmem:[#allocation8 + $0xa0] sm:$0xff]
        %v224 = vld [vmem:[#allocation8 + $0xa8] sm:$0xff]
        %v225 = vld [vmem:[#allocation8 + $0xb0] sm:$0xff]
        %v226 = vld [vmem:[#allocation8 + $0xb8] sm:$0xff]
        %v227 = vld [vmem:[#allocation8 + $0xc0] sm:$0xff]
        %v228 = vld [vmem:[#allocation8 + $0xc8] sm:$0xff]
        %v229 = vld [vmem:[#allocation8 + $0xd0] sm:$0xff]
        %v230 = vld [vmem:[#allocation8 + $0xd8] sm:$0xff]
        %v231 = vld [vmem:[#allocation8 + $0xe0] sm:$0xff]
        %v232 = vld [vmem:[#allocation8 + $0xe8] sm:$0xff]
        %v233 = vld [vmem:[#allocation8 + $0xf0] sm:$0xff]
        %v234 = vld [vmem:[#allocation8 + $0xf8] sm:$0xff]
        %v235 = vld [vmem:[#allocation8 + $0x100] sm:$0xff]
        %v236 = vld [vmem:[#allocation8 + $0x108] sm:$0xff]
        %v237 = vld [vmem:[#allocation8 + $0x110] sm:$0xff]
        %v238 = vld [vmem:[#allocation8 + $0x118] sm:$0xff]
        %v239 = vld [vmem:[#allocation8 + $0x120] sm:$0xff]
        %v240 = vld [vmem:[#allocation8 + $0x128] sm:$0xff]
        %v241 = vld [vmem:[#allocation8 + $0x130] sm:$0xff]
        %v242 = vld [vmem:[#allocation8 + $0x138] sm:$0xff]
        %v243 = vld [vmem:[#allocation8 + $0x140] sm:$0xff]
        %v244 = vld [vmem:[#allocation8 + $0x148] sm:$0xff]
        %v245 = vld [vmem:[#allocation8 + $0x150] sm:$0xff]
        %v246 = vld [vmem:[#allocation8 + $0x158] sm:$0xff]
        %v247 = vld [vmem:[#allocation8 + $0x160] sm:$0xff]
        %v248 = vld [vmem:[#allocation8 + $0x168] sm:$0xff]
        %v249 = vld [vmem:[#allocation8 + $0x170] sm:$0xff]
        %v250 = vld [vmem:[#allocation8 + $0x178] sm:$0xff]
        %v251 = vld [vmem:[#allocation8 + $0x180] sm:$0xff]
        %v252 = vld [vmem:[#allocation8 + $0x188] sm:$0xff]
        %v253 = vld [vmem:[#allocation8 + $0x190] sm:$0xff]
        %v254 = vld [vmem:[#allocation8 + $0x198] sm:$0xff]
        %v255 = vld [vmem:[#allocation8 + $0x1a0] sm:$0xff]
        %v256 = vld [vmem:[#allocation8 + $0x1a8] sm:$0xff]
        %v257 = vld [vmem:[#allocation8 + $0x1b0] sm:$0xff]
        %v258 = vld [vmem:[#allocation8 + $0x1b8] sm:$0xff]
        %v259 = vld [vmem:[#allocation8 + $0x1c0] sm:$0xff]
        %v260 = vld [vmem:[#allocation8 + $0x1c8] sm:$0xff]
        %v261 = vld [vmem:[#allocation8 + $0x1d0] sm:$0xff]
        %v262 = vld [vmem:[#allocation8 + $0x1d8] sm:$0xff]
        %v263 = vld [vmem:[#allocation8 + $0x1e0] sm:$0xff]
        %v264 = vld [vmem:[#allocation8 + $0x1e8] sm:$0xff]
        %v265 = vld [vmem:[#allocation8 + $0x1f0] sm:$0xff]
        %v266 = vld [vmem:[#allocation8 + $0x1f8] sm:$0xff]
        %267 = vmatprep.subr.mxu0 %v204
        %268 = vmatpush1.msra.mxu0 %v203
        %269 = vmatprep.subr.mxu0 %v208
        %270 = vmatpush1.msra.mxu0 %v207
        %271 = vmatprep.subr.mxu0 %v212
        %272 = vmatpush1.msra.mxu0 %v211
        %273 = vmatprep.subr.mxu0 %v216
        %274 = vmatpush1.msra.mxu0 %v215
        %275 = vmatprep.subr.mxu0 %v220
        %276 = vmatpush1.msra.mxu0 %v219
        %277 = vmatprep.subr.mxu0 %v224
        %278 = vmatpush1.msra.mxu0 %v223
        %279 = vmatprep.subr.mxu0 %v228
        %280 = vmatpush1.msra.mxu0 %v227
        %281 = vmatprep.subr.mxu0 %v232
        %282 = vmatpush1.msra.mxu0 %v231
        %283 = vmatprep.subr.mxu0 %v236
        %284 = vmatpush1.msra.mxu0 %v235
        %285 = vmatprep.subr.mxu0 %v240
        %286 = vmatpush1.msra.mxu0 %v239
        %287 = vmatprep.subr.mxu0 %v244
        %288 = vmatpush1.msra.mxu0 %v243
        %289 = vmatprep.subr.mxu0 %v248
        %290 = vmatpush1.msra.mxu0 %v247
        %291 = vmatprep.subr.mxu0 %v252
        %292 = vmatpush1.msra.mxu0 %v251
        %293 = vmatprep.subr.mxu0 %v256
        %294 = vmatpush1.msra.mxu0 %v255
        %295 = vmatprep.subr.mxu0 %v260
        %296 = vmatpush1.msra.mxu0 %v259
        %297 = vmatprep.subr.mxu0 %v264
        %298 = vmatpush1.msra.mxu0 %v263
        %299 = vmatprep.subr.mxu0 0.0
        %300 = vmatpush1.msra.mxu0 0.0
        %301 = vmatprep.subr.mxu0 0.0
        %302 = vmatpush1.msra.mxu0 0.0
        %303 = vmatprep.subr.mxu0 0.0
        %304 = vmatpush1.msra.mxu0 0.0
        %305 = vmatprep.subr.mxu0 0.0
        %306 = vmatpush1.msra.mxu0 0.0
        %307 = vmatprep.subr.mxu0 0.0
        %308 = vmatpush1.msra.mxu0 0.0
        %309 = vmatprep.subr.mxu0 0.0
        %310 = vmatpush1.msra.mxu0 0.0
        %311 = vmatprep.subr.mxu0 0.0
        %312 = vmatpush1.msra.mxu0 0.0
        %313 = vmatprep.subr.mxu0 0.0
        %314 = vmatpush1.msra.mxu0 0.0
        %315 = vmatprep.subr.mxu0 0.0
        %316 = vmatpush1.msra.mxu0 0.0
        %317 = vmatprep.subr.mxu0 0.0
        %318 = vmatpush1.msra.mxu0 0.0
        %319 = vmatprep.subr.mxu0 0.0
        %320 = vmatpush1.msra.mxu0 0.0
        %321 = vmatprep.subr.mxu0 0.0
        %322 = vmatpush1.msra.mxu0 0.0
        %323 = vmatprep.subr.mxu0 0.0
        %324 = vmatpush1.msra.mxu0 0.0
        %325 = vmatprep.subr.mxu0 0.0
        %326 = vmatpush1.msra.mxu0 0.0
        %327 = vmatprep.subr.mxu0 0.0
        %328 = vmatpush1.msra.mxu0 0.0
        %329 = vmatprep.subr.mxu0 0.0
        %330 = vmatpush1.msra.mxu0 0.0
        %331 = vmatprep.mubr.f32.mxu0 0.0
        %332 = vmatmul.mubr.f32.gmra.mrb[0].mxu0 0.0
        %v333 = vpop.f32.mrb[0].mxu0
        %v334 = vadd.f32 0.0, %v333
        %v335 = vpop.f32.mrb[0].mxu0
        %v336 = vadd.f32 0.0, %v335
        %337 = vdwg.mxu0
        %338 = vmatprep.subr.mxu0 %v206
        %339 = vmatpush1.msra.mxu0 %v205
        %340 = vmatprep.subr.mxu0 %v210
        %341 = vmatpush1.msra.mxu0 %v209
        %342 = vmatprep.subr.mxu0 %v214
        %343 = vmatpush1.msra.mxu0 %v213
        %344 = vmatprep.subr.mxu0 %v218
        %345 = vmatpush1.msra.mxu0 %v217
        %346 = vmatprep.subr.mxu0 %v222
        %347 = vmatpush1.msra.mxu0 %v221
        %348 = vmatprep.subr.mxu0 %v226
        %349 = vmatpush1.msra.mxu0 %v225
        %350 = vmatprep.subr.mxu0 %v230
        %351 = vmatpush1.msra.mxu0 %v229
        %352 = vmatprep.subr.mxu0 %v234
        %353 = vmatpush1.msra.mxu0 %v233
        %354 = vmatprep.subr.mxu0 %v238
        %355 = vmatpush1.msra.mxu0 %v237
        %356 = vmatprep.subr.mxu0 %v242
        %357 = vmatpush1.msra.mxu0 %v241
        %358 = vmatprep.subr.mxu0 %v246
        %359 = vmatpush1.msra.mxu0 %v245
        %360 = vmatprep.subr.mxu0 %v250
        %361 = vmatpush1.msra.mxu0 %v249
        %362 = vmatprep.subr.mxu0 %v254
        %363 = vmatpush1.msra.mxu0 %v253
        %364 = vmatprep.subr.mxu0 %v258
        %365 = vmatpush1.msra.mxu0 %v257
        %366 = vmatprep.subr.mxu0 %v262
        %367 = vmatpush1.msra.mxu0 %v261
        %368 = vmatprep.subr.mxu0 %v266
        %369 = vmatpush1.msra.mxu0 %v265
        %370 = vmatprep.subr.mxu0 0.0
        %371 = vmatpush1.msra.mxu0 0.0
        %372 = vmatprep.subr.mxu0 0.0
        %373 = vmatpush1.msra.mxu0 0.0
        %374 = vmatprep.subr.mxu0 0.0
        %375 = vmatpush1.msra.mxu0 0.0
        %376 = vmatprep.subr.mxu0 0.0
        %377 = vmatpush1.msra.mxu0 0.0
        %378 = vmatprep.subr.mxu0 0.0
        %379 = vmatpush1.msra.mxu0 0.0
        %380 = vmatprep.subr.mxu0 0.0
        %381 = vmatpush1.msra.mxu0 0.0
        %382 = vmatprep.subr.mxu0 0.0
        %383 = vmatpush1.msra.mxu0 0.0
        %384 = vmatprep.subr.mxu0 0.0
        %385 = vmatpush1.msra.mxu0 0.0
        %386 = vmatprep.subr.mxu0 0.0
        %387 = vmatpush1.msra.mxu0 0.0
        %388 = vmatprep.subr.mxu0 0.0
        %389 = vmatpush1.msra.mxu0 0.0
        %390 = vmatprep.subr.mxu0 0.0
        %391 = vmatpush1.msra.mxu0 0.0
        %392 = vmatprep.subr.mxu0 0.0
        %393 = vmatpush1.msra.mxu0 0.0
        %394 = vmatprep.subr.mxu0 0.0
        %395 = vmatpush1.msra.mxu0 0.0
        %396 = vmatprep.subr.mxu0 0.0
        %397 = vmatpush1.msra.mxu0 0.0
        %398 = vmatprep.subr.mxu0 0.0
        %399 = vmatpush1.msra.mxu0 0.0
        %400 = vmatprep.subr.mxu0 0.0
        %401 = vmatpush1.msra.mxu0 0.0
        %402 = vmatprep.mubr.f32.mxu0 0.0
        %403 = vmatmul.mubr.f32.gmra.mrb[0].mxu0 0.0
        %v404 = vpop.f32.mrb[0].mxu0
        %v405 = vadd.f32 0.0, %v404
        %v406 = vpop.f32.mrb[0].mxu0
        %v407 = vadd.f32 0.0, %v406
        %408 = vdwg.mxu0
        %v409 = vadd.f32 %v193, %v334
        %v410 = vadd.f32 %v194, %v336
        %v411 = vadd.f32 %v195, %v405
        %v412 = vadd.f32 %v196, %v407
        %v413 = vmul.f32 %v409, 0.5
        %v414 = vmul.f32 %v410, 0.5
        %v415 = vmul.f32 %v411, 0.5
        %v416 = vtanh.pop %v413
        %v417 = vtanh.pop %v414
        %v418 = vtanh.pop %v415
        %v419 = vmul.f32 %v416, 0.5
        %v420 = vmul.f32 %v417, 0.5
        %v421 = vmul.f32 %v418, 0.5
        %v422 = vadd.f32 %v419, 0.5
        %v423 = vadd.f32 %v420, 0.5
        %v424 = vadd.f32 %v421, 0.5
        %v425 = vtanh.pop %v412
        %v426 = vmul.f32 %v423, %v202
        %v427 = vmul.f32 %v422, %v425
        %v428 = vadd.f32 %v426, %v427
        %v429 = vtanh.pop %v428
        %v430 = vmul.f32 %v424, %v429
        %431 = vst [vmem:[%s200] sm:$0x1] %v428
        %s432 = sadd.s32 %s198, 1
        %s433 = sld [smem:[#allocation4 + %s432]]
        %s434 = scalar_lea.vmem [#allocation2], %s433
        %v435 = vld [vmem:[%s434] sm:$0x1]
        %v436 = vsel %vm189, %v435, %v428
        %v437 = vld [vmem:[#allocation8] sm:$0xff]
        %v438 = vld [vmem:[#allocation8 + $0x8] sm:$0xff]
        %v439 = vld [vmem:[#allocation8 + $0x10] sm:$0xff]
        %v440 = vld [vmem:[#allocation8 + $0x18] sm:$0xff]
        %v441 = vld [vmem:[#allocation8 + $0x20] sm:$0xff]
        %v442 = vld [vmem:[#allocation8 + $0x28] sm:$0xff]
        %v443 = vld [vmem:[#allocation8 + $0x30] sm:$0xff]
        %v444 = vld [vmem:[#allocation8 + $0x38] sm:$0xff]
        %v445 = vld [vmem:[#allocation8 + $0x40] sm:$0xff]
        %v446 = vld [vmem:[#allocation8 + $0x48] sm:$0xff]
        %v447 = vld [vmem:[#allocation8 + $0x50] sm:$0xff]
        %v448 = vld [vmem:[#allocation8 + $0x58] sm:$0xff]
        %v449 = vld [vmem:[#allocation8 + $0x60] sm:$0xff]
        %v450 = vld [vmem:[#allocation8 + $0x68] sm:$0xff]
        %v451 = vld [vmem:[#allocation8 + $0x70] sm:$0xff]
        %v452 = vld [vmem:[#allocation8 + $0x78] sm:$0xff]
        %v453 = vld [vmem:[#allocation8 + $0x80] sm:$0xff]
        %v454 = vld [vmem:[#allocation8 + $0x88] sm:$0xff]
        %v455 = vld [vmem:[#allocation8 + $0x90] sm:$0xff]
        %v456 = vld [vmem:[#allocation8 + $0x98] sm:$0xff]
        %v457 = vld [vmem:[#allocation8 + $0xa0] sm:$0xff]
        %v458 = vld [vmem:[#allocation8 + $0xa8] sm:$0xff]
        %v459 = vld [vmem:[#allocation8 + $0xb0] sm:$0xff]
        %v460 = vld [vmem:[#allocation8 + $0xb8] sm:$0xff]
        %v461 = vld [vmem:[#allocation8 + $0xc0] sm:$0xff]
        %v462 = vld [vmem:[#allocation8 + $0xc8] sm:$0xff]
        %v463 = vld [vmem:[#allocation8 + $0xd0] sm:$0xff]
        %v464 = vld [vmem:[#allocation8 + $0xd8] sm:$0xff]
        %v465 = vld [vmem:[#allocation8 + $0xe0] sm:$0xff]
        %v466 = vld [vmem:[#allocation8 + $0xe8] sm:$0xff]
        %v467 = vld [vmem:[#allocation8 + $0xf0] sm:$0xff]
        %v468 = vld [vmem:[#allocation8 + $0xf8] sm:$0xff]
        %v469 = vld [vmem:[#allocation8 + $0x100] sm:$0xff]
        %v470 = vld [vmem:[#allocation8 + $0x108] sm:$0xff]
        %v471 = vld [vmem:[#allocation8 + $0x110] sm:$0xff]
        %v472 = vld [vmem:[#allocation8 + $0x118] sm:$0xff]
        %v473 = vld [vmem:[#allocation8 + $0x120] sm:$0xff]
        %v474 = vld [vmem:[#allocation8 + $0x128] sm:$0xff]
        %v475 = vld [vmem:[#allocation8 + $0x130] sm:$0xff]
        %v476 = vld [vmem:[#allocation8 + $0x138] sm:$0xff]
        %v477 = vld [vmem:[#allocation8 + $0x140] sm:$0xff]
        %v478 = vld [vmem:[#allocation8 + $0x148] sm:$0xff]
        %v479 = vld [vmem:[#allocation8 + $0x150] sm:$0xff]
        %v480 = vld [vmem:[#allocation8 + $0x158] sm:$0xff]
        %v481 = vld [vmem:[#allocation8 + $0x160] sm:$0xff]
        %v482 = vld [vmem:[#allocation8 + $0x168] sm:$0xff]
        %v483 = vld [vmem:[#allocation8 + $0x170] sm:$0xff]
        %v484 = vld [vmem:[#allocation8 + $0x178] sm:$0xff]
        %v485 = vld [vmem:[#allocation8 + $0x180] sm:$0xff]
        %v486 = vld [vmem:[#allocation8 + $0x188] sm:$0xff]
        %v487 = vld [vmem:[#allocation8 + $0x190] sm:$0xff]
        %v488 = vld [vmem:[#allocation8 + $0x198] sm:$0xff]
        %v489 = vld [vmem:[#allocation8 + $0x1a0] sm:$0xff]
        %v490 = vld [vmem:[#allocation8 + $0x1a8] sm:$0xff]
        %v491 = vld [vmem:[#allocation8 + $0x1b0] sm:$0xff]
        %v492 = vld [vmem:[#allocation8 + $0x1b8] sm:$0xff]
        %v493 = vld [vmem:[#allocation8 + $0x1c0] sm:$0xff]
        %v494 = vld [vmem:[#allocation8 + $0x1c8] sm:$0xff]
        %v495 = vld [vmem:[#allocation8 + $0x1d0] sm:$0xff]
        %v496 = vld [vmem:[#allocation8 + $0x1d8] sm:$0xff]
        %v497 = vld [vmem:[#allocation8 + $0x1e0] sm:$0xff]
        %v498 = vld [vmem:[#allocation8 + $0x1e8] sm:$0xff]
        %v499 = vld [vmem:[#allocation8 + $0x1f0] sm:$0xff]
        %v500 = vld [vmem:[#allocation8 + $0x1f8] sm:$0xff]
        %501 = vmatprep.subr.mxu0 %v438
        %502 = vmatpush1.msra.mxu0 %v437
        %503 = vmatprep.subr.mxu0 %v442
        %504 = vmatpush1.msra.mxu0 %v441
        %505 = vmatprep.subr.mxu0 %v446
        %506 = vmatpush1.msra.mxu0 %v445
        %507 = vmatprep.subr.mxu0 %v450
        %508 = vmatpush1.msra.mxu0 %v449
        %509 = vmatprep.subr.mxu0 %v454
        %510 = vmatpush1.msra.mxu0 %v453
        %511 = vmatprep.subr.mxu0 %v458
        %512 = vmatpush1.msra.mxu0 %v457
        %513 = vmatprep.subr.mxu0 %v462
        %514 = vmatpush1.msra.mxu0 %v461
        %515 = vmatprep.subr.mxu0 %v466
        %516 = vmatpush1.msra.mxu0 %v465
        %517 = vmatprep.subr.mxu0 %v470
        %518 = vmatpush1.msra.mxu0 %v469
        %519 = vmatprep.subr.mxu0 %v474
        %520 = vmatpush1.msra.mxu0 %v473
        %521 = vmatprep.subr.mxu0 %v478
        %522 = vmatpush1.msra.mxu0 %v477
        %523 = vmatprep.subr.mxu0 %v482
        %524 = vmatpush1.msra.mxu0 %v481
        %525 = vmatprep.subr.mxu0 %v486
        %526 = vmatpush1.msra.mxu0 %v485
        %527 = vmatprep.subr.mxu0 %v490
        %528 = vmatpush1.msra.mxu0 %v489
        %529 = vmatprep.subr.mxu0 %v494
        %530 = vmatpush1.msra.mxu0 %v493
        %531 = vmatprep.subr.mxu0 %v498
        %532 = vmatpush1.msra.mxu0 %v497
        %533 = vmatprep.subr.mxu0 0.0
        %534 = vmatpush1.msra.mxu0 0.0
        %535 = vmatprep.subr.mxu0 0.0
        %536 = vmatpush1.msra.mxu0 0.0
        %537 = vmatprep.subr.mxu0 0.0
        %538 = vmatpush1.msra.mxu0 0.0
        %539 = vmatprep.subr.mxu0 0.0
        %540 = vmatpush1.msra.mxu0 0.0
        %541 = vmatprep.subr.mxu0 0.0
        %542 = vmatpush1.msra.mxu0 0.0
        %543 = vmatprep.subr.mxu0 0.0
        %544 = vmatpush1.msra.mxu0 0.0
        %545 = vmatprep.subr.mxu0 0.0
        %546 = vmatpush1.msra.mxu0 0.0
        %547 = vmatprep.subr.mxu0 0.0
        %548 = vmatpush1.msra.mxu0 0.0
        %549 = vmatprep.subr.mxu0 0.0
        %550 = vmatpush1.msra.mxu0 0.0
        %551 = vmatprep.subr.mxu0 0.0
        %552 = vmatpush1.msra.mxu0 0.0
        %553 = vmatprep.subr.mxu0 0.0
        %554 = vmatpush1.msra.mxu0 0.0
        %555 = vmatprep.subr.mxu0 0.0
        %556 = vmatpush1.msra.mxu0 0.0
        %557 = vmatprep.subr.mxu0 0.0
        %558 = vmatpush1.msra.mxu0 0.0
        %559 = vmatprep.subr.mxu0 0.0
        %560 = vmatpush1.msra.mxu0 0.0
        %561 = vmatprep.subr.mxu0 0.0
        %562 = vmatpush1.msra.mxu0 0.0
        %563 = vmatprep.subr.mxu0 0.0
        %564 = vmatpush1.msra.mxu0 0.0
        %565 = vmatprep.mubr.f32.mxu0 0.0
        %566 = vmatmul.mubr.f32.gmra.mrb[0].mxu0 %v430
        %v567 = vpop.f32.mrb[0].mxu0
        %v568 = vadd.f32 0.0, %v567
        %v569 = vpop.f32.mrb[0].mxu0
        %v570 = vadd.f32 0.0, %v569
        %571 = vdwg.mxu0
        %572 = vmatprep.subr.mxu0 %v440
        %573 = vmatpush1.msra.mxu0 %v439
        %574 = vmatprep.subr.mxu0 %v444
        %575 = vmatpush1.msra.mxu0 %v443
        %576 = vmatprep.subr.mxu0 %v448
        %577 = vmatpush1.msra.mxu0 %v447
        %578 = vmatprep.subr.mxu0 %v452
        %579 = vmatpush1.msra.mxu0 %v451
        %580 = vmatprep.subr.mxu0 %v456
        %581 = vmatpush1.msra.mxu0 %v455
        %582 = vmatprep.subr.mxu0 %v460
        %583 = vmatpush1.msra.mxu0 %v459
        %584 = vmatprep.subr.mxu0 %v464
        %585 = vmatpush1.msra.mxu0 %v463
        %586 = vmatprep.subr.mxu0 %v468
        %587 = vmatpush1.msra.mxu0 %v467
        %588 = vmatprep.subr.mxu0 %v472
        %589 = vmatpush1.msra.mxu0 %v471
        %590 = vmatprep.subr.mxu0 %v476
        %591 = vmatpush1.msra.mxu0 %v475
        %592 = vmatprep.subr.mxu0 %v480
        %593 = vmatpush1.msra.mxu0 %v479
        %594 = vmatprep.subr.mxu0 %v484
        %595 = vmatpush1.msra.mxu0 %v483
        %596 = vmatprep.subr.mxu0 %v488
        %597 = vmatpush1.msra.mxu0 %v487
        %598 = vmatprep.subr.mxu0 %v492
        %599 = vmatpush1.msra.mxu0 %v491
        %600 = vmatprep.subr.mxu0 %v496
        %601 = vmatpush1.msra.mxu0 %v495
        %602 = vmatprep.subr.mxu0 %v500
        %603 = vmatpush1.msra.mxu0 %v499
        %604 = vmatprep.subr.mxu0 0.0
        %605 = vmatpush1.msra.mxu0 0.0
        %606 = vmatprep.subr.mxu0 0.0
        %607 = vmatpush1.msra.mxu0 0.0
        %608 = vmatprep.subr.mxu0 0.0
        %609 = vmatpush1.msra.mxu0 0.0
        %610 = vmatprep.subr.mxu0 0.0
        %611 = vmatpush1.msra.mxu0 0.0
        %612 = vmatprep.subr.mxu0 0.0
        %613 = vmatpush1.msra.mxu0 0.0
        %614 = vmatprep.subr.mxu0 0.0
        %615 = vmatpush1.msra.mxu0 0.0
        %616 = vmatprep.subr.mxu0 0.0
        %617 = vmatpush1.msra.mxu0 0.0
        %618 = vmatprep.subr.mxu0 0.0
        %619 = vmatpush1.msra.mxu0 0.0
        %620 = vmatprep.subr.mxu0 0.0
        %621 = vmatpush1.msra.mxu0 0.0
        %622 = vmatprep.subr.mxu0 0.0
        %623 = vmatpush1.msra.mxu0 0.0
        %624 = vmatprep.subr.mxu0 0.0
        %625 = vmatpush1.msra.mxu0 0.0
        %626 = vmatprep.subr.mxu0 0.0
        %627 = vmatpush1.msra.mxu0 0.0
        %628 = vmatprep.subr.mxu0 0.0
        %629 = vmatpush1.msra.mxu0 0.0
        %630 = vmatprep.subr.mxu0 0.0
        %631 = vmatpush1.msra.mxu0 0.0
        %632 = vmatprep.subr.mxu0 0.0
        %633 = vmatpush1.msra.mxu0 0.0
        %634 = vmatprep.subr.mxu0 0.0
        %635 = vmatpush1.msra.mxu0 0.0
        %636 = vmatprep.mubr.f32.mxu0 0.0
        %637 = vmatmul.mubr.f32.gmra.mrb[0].mxu0 %v430
        %v638 = vpop.f32.mrb[0].mxu0
        %v639 = vadd.f32 0.0, %v638
        %v640 = vpop.f32.mrb[0].mxu0
        %v641 = vadd.f32 0.0, %v640
        %642 = vdwg.mxu0
        %v647 = vrot.slane %v568, 7
        %v648 = vrot.slane %v570, 7
        %v649 = vrot.slane %v639, 7
        %v650 = vrot.slane %v641, 7
        %v655 = vadd.f32 %v193, %v647
        %v656 = vadd.f32 %v194, %v648
        %v657 = vadd.f32 %v195, %v649
        %v658 = vadd.f32 %v196, %v650
        %v659 = vmul.f32 %v655, 0.5
        %v660 = vmul.f32 %v656, 0.5
        %v661 = vmul.f32 %v657, 0.5
        %v662 = vtanh.pop %v659
        %v663 = vtanh.pop %v660
        %v664 = vtanh.pop %v661
        %v665 = vmul.f32 %v662, 0.5
        %v666 = vmul.f32 %v663, 0.5
        %v667 = vmul.f32 %v664, 0.5
        %v668 = vadd.f32 %v665, 0.5
        %v669 = vadd.f32 %v666, 0.5
        %v670 = vadd.f32 %v667, 0.5
        %v671 = vtanh.pop %v658
        %v673 = vrot.slane %v436, 7
        %v675 = vmul.f32 %v669, %v673
        %v676 = vmul.f32 %v668, %v671
        %v677 = vadd.f32 %v675, %v676
        %v678 = vtanh.pop %v677
        %v679 = vmul.f32 %v670, %v678
        %680 = vst [vmem:[%s434 - $0x1] sm:$0x2] %v677
        %s681 = sadd.s32 %s198, 2
        %s682 = sld [smem:[#allocation4 + %s681]]
        %s683 = scalar_lea.vmem [#allocation2], %s682
        %v684 = vld [vmem:[%s683] sm:$0x1]
        %v686 = vrot.slane %v677, 1
        %v688 = vsel %vm189, %v684, %v686
        %v689 = vld [vmem:[#allocation8] sm:$0xff]
        %v690 = vld [vmem:[#allocation8 + $0x8] sm:$0xff]
        %v691 = vld [vmem:[#allocation8 + $0x10] sm:$0xff]
        %v692 = vld [vmem:[#allocation8 + $0x18] sm:$0xff]
        %v693 = vld [vmem:[#allocation8 + $0x20] sm:$0xff]
        %v694 = vld [vmem:[#allocation8 + $0x28] sm:$0xff]
        %v695 = vld [vmem:[#allocation8 + $0x30] sm:$0xff]
        %v696 = vld [vmem:[#allocation8 + $0x38] sm:$0xff]
        %v697 = vld [vmem:[#allocation8 + $0x40] sm:$0xff]
        %v698 = vld [vmem:[#allocation8 + $0x48] sm:$0xff]
        %v699 = vld [vmem:[#allocation8 + $0x50] sm:$0xff]
        %v700 = vld [vmem:[#allocation8 + $0x58] sm:$0xff]
        %v701 = vld [vmem:[#allocation8 + $0x60] sm:$0xff]
        %v702 = vld [vmem:[#allocation8 + $0x68] sm:$0xff]
        %v703 = vld [vmem:[#allocation8 + $0x70] sm:$0xff]
        %v704 = vld [vmem:[#allocation8 + $0x78] sm:$0xff]
        %v705 = vld [vmem:[#allocation8 + $0x80] sm:$0xff]
        %v706 = vld [vmem:[#allocation8 + $0x88] sm:$0xff]
        %v707 = vld [vmem:[#allocation8 + $0x90] sm:$0xff]
        %v708 = vld [vmem:[#allocation8 + $0x98] sm:$0xff]
        %v709 = vld [vmem:[#allocation8 + $0xa0] sm:$0xff]
        %v710 = vld [vmem:[#allocation8 + $0xa8] sm:$0xff]
        %v711 = vld [vmem:[#allocation8 + $0xb0] sm:$0xff]
        %v712 = vld [vmem:[#allocation8 + $0xb8] sm:$0xff]
        %v713 = vld [vmem:[#allocation8 + $0xc0] sm:$0xff]
        %v714 = vld [vmem:[#allocation8 + $0xc8] sm:$0xff]
        %v715 = vld [vmem:[#allocation8 + $0xd0] sm:$0xff]
        %v716 = vld [vmem:[#allocation8 + $0xd8] sm:$0xff]
        %v717 = vld [vmem:[#allocation8 + $0xe0] sm:$0xff]
        %v718 = vld [vmem:[#allocation8 + $0xe8] sm:$0xff]
        %v719 = vld [vmem:[#allocation8 + $0xf0] sm:$0xff]
        %v720 = vld [vmem:[#allocation8 + $0xf8] sm:$0xff]
        %v721 = vld [vmem:[#allocation8 + $0x100] sm:$0xff]
        %v722 = vld [vmem:[#allocation8 + $0x108] sm:$0xff]
        %v723 = vld [vmem:[#allocation8 + $0x110] sm:$0xff]
        %v724 = vld [vmem:[#allocation8 + $0x118] sm:$0xff]
        %v725 = vld [vmem:[#allocation8 + $0x120] sm:$0xff]
        %v726 = vld [vmem:[#allocation8 + $0x128] sm:$0xff]
        %v727 = vld [vmem:[#allocation8 + $0x130] sm:$0xff]
        %v728 = vld [vmem:[#allocation8 + $0x138] sm:$0xff]
        %v729 = vld [vmem:[#allocation8 + $0x140] sm:$0xff]
        %v730 = vld [vmem:[#allocation8 + $0x148] sm:$0xff]
        %v731 = vld [vmem:[#allocation8 + $0x150] sm:$0xff]
        %v732 = vld [vmem:[#allocation8 + $0x158] sm:$0xff]
        %v733 = vld [vmem:[#allocation8 + $0x160] sm:$0xff]
        %v734 = vld [vmem:[#allocation8 + $0x168] sm:$0xff]
        %v735 = vld [vmem:[#allocation8 + $0x170] sm:$0xff]
        %v736 = vld [vmem:[#allocation8 + $0x178] sm:$0xff]
        %v737 = vld [vmem:[#allocation8 + $0x180] sm:$0xff]
        %v738 = vld [vmem:[#allocation8 + $0x188] sm:$0xff]
        %v739 = vld [vmem:[#allocation8 + $0x190] sm:$0xff]
        %v740 = vld [vmem:[#allocation8 + $0x198] sm:$0xff]
        %v741 = vld [vmem:[#allocation8 + $0x1a0] sm:$0xff]
        %v742 = vld [vmem:[#allocation8 + $0x1a8] sm:$0xff]
        %v743 = vld [vmem:[#allocation8 + $0x1b0] sm:$0xff]
        %v744 = vld [vmem:[#allocation8 + $0x1b8] sm:$0xff]
        %v745 = vld [vmem:[#allocation8 + $0x1c0] sm:$0xff]
        %v746 = vld [vmem:[#allocation8 + $0x1c8] sm:$0xff]
        %v747 = vld [vmem:[#allocation8 + $0x1d0] sm:$0xff]
        %v748 = vld [vmem:[#allocation8 + $0x1d8] sm:$0xff]
        %v749 = vld [vmem:[#allocation8 + $0x1e0] sm:$0xff]
        %v750 = vld [vmem:[#allocation8 + $0x1e8] sm:$0xff]
        %v751 = vld [vmem:[#allocation8 + $0x1f0] sm:$0xff]
        %v752 = vld [vmem:[#allocation8 + $0x1f8] sm:$0xff]
        %v754 = vrot.slane %v679, 1
        %756 = vmatprep.subr.mxu0 %v690
        %757 = vmatpush1.msra.mxu0 %v689
        %758 = vmatprep.subr.mxu0 %v694
        %759 = vmatpush1.msra.mxu0 %v693
        %760 = vmatprep.subr.mxu0 %v698
        %761 = vmatpush1.msra.mxu0 %v697
        %762 = vmatprep.subr.mxu0 %v702
        %763 = vmatpush1.msra.mxu0 %v701
        %764 = vmatprep.subr.mxu0 %v706
        %765 = vmatpush1.msra.mxu0 %v705
        %766 = vmatprep.subr.mxu0 %v710
        %767 = vmatpush1.msra.mxu0 %v709
        %768 = vmatprep.subr.mxu0 %v714
        %769 = vmatpush1.msra.mxu0 %v713
        %770 = vmatprep.subr.mxu0 %v718
        %771 = vmatpush1.msra.mxu0 %v717
        %772 = vmatprep.subr.mxu0 %v722
        %773 = vmatpush1.msra.mxu0 %v721
        %774 = vmatprep.subr.mxu0 %v726
        %775 = vmatpush1.msra.mxu0 %v725
        %776 = vmatprep.subr.mxu0 %v730
        %777 = vmatpush1.msra.mxu0 %v729
        %778 = vmatprep.subr.mxu0 %v734
        %779 = vmatpush1.msra.mxu0 %v733
        %780 = vmatprep.subr.mxu0 %v738
        %781 = vmatpush1.msra.mxu0 %v737
        %782 = vmatprep.subr.mxu0 %v742
        %783 = vmatpush1.msra.mxu0 %v741
        %784 = vmatprep.subr.mxu0 %v746
        %785 = vmatpush1.msra.mxu0 %v745
        %786 = vmatprep.subr.mxu0 %v750
        %787 = vmatpush1.msra.mxu0 %v749
        %788 = vmatprep.subr.mxu0 0.0
        %789 = vmatpush1.msra.mxu0 0.0
        %790 = vmatprep.subr.mxu0 0.0
        %791 = vmatpush1.msra.mxu0 0.0
        %792 = vmatprep.subr.mxu0 0.0
        %793 = vmatpush1.msra.mxu0 0.0
        %794 = vmatprep.subr.mxu0 0.0
        %795 = vmatpush1.msra.mxu0 0.0
        %796 = vmatprep.subr.mxu0 0.0
        %797 = vmatpush1.msra.mxu0 0.0
        %798 = vmatprep.subr.mxu0 0.0
        %799 = vmatpush1.msra.mxu0 0.0
        %800 = vmatprep.subr.mxu0 0.0
        %801 = vmatpush1.msra.mxu0 0.0
        %802 = vmatprep.subr.mxu0 0.0
        %803 = vmatpush1.msra.mxu0 0.0
        %804 = vmatprep.subr.mxu0 0.0
        %805 = vmatpush1.msra.mxu0 0.0
        %806 = vmatprep.subr.mxu0 0.0
        %807 = vmatpush1.msra.mxu0 0.0
        %808 = vmatprep.subr.mxu0 0.0
        %809 = vmatpush1.msra.mxu0 0.0
        %810 = vmatprep.subr.mxu0 0.0
        %811 = vmatpush1.msra.mxu0 0.0
        %812 = vmatprep.subr.mxu0 0.0
        %813 = vmatpush1.msra.mxu0 0.0
        %814 = vmatprep.subr.mxu0 0.0
        %815 = vmatpush1.msra.mxu0 0.0
        %816 = vmatprep.subr.mxu0 0.0
        %817 = vmatpush1.msra.mxu0 0.0
        %818 = vmatprep.subr.mxu0 0.0
        %819 = vmatpush1.msra.mxu0 0.0
        %820 = vmatprep.mubr.f32.mxu0 0.0
        %821 = vmatmul.mubr.f32.gmra.mrb[0].mxu0 %v754
        %v822 = vpop.f32.mrb[0].mxu0
        %v823 = vadd.f32 0.0, %v822
        %v824 = vpop.f32.mrb[0].mxu0
        %v825 = vadd.f32 0.0, %v824
        %826 = vdwg.mxu0
        %827 = vmatprep.subr.mxu0 %v692
        %828 = vmatpush1.msra.mxu0 %v691
        %829 = vmatprep.subr.mxu0 %v696
        %830 = vmatpush1.msra.mxu0 %v695
        %831 = vmatprep.subr.mxu0 %v700
        %832 = vmatpush1.msra.mxu0 %v699
        %833 = vmatprep.subr.mxu0 %v704
        %834 = vmatpush1.msra.mxu0 %v703
        %835 = vmatprep.subr.mxu0 %v708
        %836 = vmatpush1.msra.mxu0 %v707
        %837 = vmatprep.subr.mxu0 %v712
        %838 = vmatpush1.msra.mxu0 %v711
        %839 = vmatprep.subr.mxu0 %v716
        %840 = vmatpush1.msra.mxu0 %v715
        %841 = vmatprep.subr.mxu0 %v720
        %842 = vmatpush1.msra.mxu0 %v719
        %843 = vmatprep.subr.mxu0 %v724
        %844 = vmatpush1.msra.mxu0 %v723
        %845 = vmatprep.subr.mxu0 %v728
        %846 = vmatpush1.msra.mxu0 %v727
        %847 = vmatprep.subr.mxu0 %v732
        %848 = vmatpush1.msra.mxu0 %v731
        %849 = vmatprep.subr.mxu0 %v736
        %850 = vmatpush1.msra.mxu0 %v735
        %851 = vmatprep.subr.mxu0 %v740
        %852 = vmatpush1.msra.mxu0 %v739
        %853 = vmatprep.subr.mxu0 %v744
        %854 = vmatpush1.msra.mxu0 %v743
        %855 = vmatprep.subr.mxu0 %v748
        %856 = vmatpush1.msra.mxu0 %v747
        %857 = vmatprep.subr.mxu0 %v752
        %858 = vmatpush1.msra.mxu0 %v751
        %859 = vmatprep.subr.mxu0 0.0
        %860 = vmatpush1.msra.mxu0 0.0
        %861 = vmatprep.subr.mxu0 0.0
        %862 = vmatpush1.msra.mxu0 0.0
        %863 = vmatprep.subr.mxu0 0.0
        %864 = vmatpush1.msra.mxu0 0.0
        %865 = vmatprep.subr.mxu0 0.0
        %866 = vmatpush1.msra.mxu0 0.0
        %867 = vmatprep.subr.mxu0 0.0
        %868 = vmatpush1.msra.mxu0 0.0
        %869 = vmatprep.subr.mxu0 0.0
        %870 = vmatpush1.msra.mxu0 0.0
        %871 = vmatprep.subr.mxu0 0.0
        %872 = vmatpush1.msra.mxu0 0.0
        %873 = vmatprep.subr.mxu0 0.0
        %874 = vmatpush1.msra.mxu0 0.0
        %875 = vmatprep.subr.mxu0 0.0
        %876 = vmatpush1.msra.mxu0 0.0
        %877 = vmatprep.subr.mxu0 0.0
        %878 = vmatpush1.msra.mxu0 0.0
        %879 = vmatprep.subr.mxu0 0.0
        %880 = vmatpush1.msra.mxu0 0.0
        %881 = vmatprep.subr.mxu0 0.0
        %882 = vmatpush1.msra.mxu0 0.0
        %883 = vmatprep.subr.mxu0 0.0
        %884 = vmatpush1.msra.mxu0 0.0
        %885 = vmatprep.subr.mxu0 0.0
        %886 = vmatpush1.msra.mxu0 0.0
        %887 = vmatprep.subr.mxu0 0.0
        %888 = vmatpush1.msra.mxu0 0.0
        %889 = vmatprep.subr.mxu0 0.0
        %890 = vmatpush1.msra.mxu0 0.0
        %891 = vmatprep.mubr.f32.mxu0 0.0
        %892 = vmatmul.mubr.f32.gmra.mrb[0].mxu0 %v754
        %v893 = vpop.f32.mrb[0].mxu0
        %v894 = vadd.f32 0.0, %v893
        %v895 = vpop.f32.mrb[0].mxu0
        %v896 = vadd.f32 0.0, %v895
        %897 = vdwg.mxu0
        %v902 = vrot.slane %v823, 6
        %v903 = vrot.slane %v825, 6
        %v904 = vrot.slane %v894, 6
        %v905 = vrot.slane %v896, 6
        %v910 = vadd.f32 %v193, %v902
        %v911 = vadd.f32 %v194, %v903
        %v912 = vadd.f32 %v195, %v904
        %v913 = vadd.f32 %v196, %v905
        %v914 = vmul.f32 %v910, 0.5
        %v915 = vmul.f32 %v911, 0.5
        %v916 = vmul.f32 %v912, 0.5
        %v917 = vtanh.pop %v914
        %v918 = vtanh.pop %v915
        %v919 = vtanh.pop %v916
        %v920 = vmul.f32 %v917, 0.5
        %v921 = vmul.f32 %v918, 0.5
        %v922 = vmul.f32 %v919, 0.5
        %v923 = vadd.f32 %v920, 0.5
        %v924 = vadd.f32 %v921, 0.5
        %v925 = vadd.f32 %v922, 0.5
        %v926 = vtanh.pop %v913
        %v928 = vrot.slane %v688, 6
        %v930 = vmul.f32 %v924, %v928
        %v931 = vmul.f32 %v923, %v926
        %v932 = vadd.f32 %v930, %v931
        %v933 = vtanh.pop %v932
        %v934 = vmul.f32 %v925, %v933
        %935 = vst [vmem:[%s683 - $0x2] sm:$0x4] %v932
        %s936 = sadd.s32 %s198, 3
        %s937 = sld [smem:[#allocation4 + %s936]]
        %s938 = scalar_lea.vmem [#allocation2], %s937
        %v939 = vld [vmem:[%s938] sm:$0x1]
        %v941 = vrot.slane %v932, 2
        %v943 = vsel %vm189, %v939, %v941
        %v944 = vld [vmem:[#allocation8] sm:$0xff]
        %v945 = vld [vmem:[#allocation8 + $0x8] sm:$0xff]
        %v946 = vld [vmem:[#allocation8 + $0x10] sm:$0xff]
        %v947 = vld [vmem:[#allocation8 + $0x18] sm:$0xff]
        %v948 = vld [vmem:[#allocation8 + $0x20] sm:$0xff]
        %v949 = vld [vmem:[#allocation8 + $0x28] sm:$0xff]
        %v950 = vld [vmem:[#allocation8 + $0x30] sm:$0xff]
        %v951 = vld [vmem:[#allocation8 + $0x38] sm:$0xff]
        %v952 = vld [vmem:[#allocation8 + $0x40] sm:$0xff]
        %v953 = vld [vmem:[#allocation8 + $0x48] sm:$0xff]
        %v954 = vld [vmem:[#allocation8 + $0x50] sm:$0xff]
        %v955 = vld [vmem:[#allocation8 + $0x58] sm:$0xff]
        %v956 = vld [vmem:[#allocation8 + $0x60] sm:$0xff]
        %v957 = vld [vmem:[#allocation8 + $0x68] sm:$0xff]
        %v958 = vld [vmem:[#allocation8 + $0x70] sm:$0xff]
        %v959 = vld [vmem:[#allocation8 + $0x78] sm:$0xff]
        %v960 = vld [vmem:[#allocation8 + $0x80] sm:$0xff]
        %v961 = vld [vmem:[#allocation8 + $0x88] sm:$0xff]
        %v962 = vld [vmem:[#allocation8 + $0x90] sm:$0xff]
        %v963 = vld [vmem:[#allocation8 + $0x98] sm:$0xff]
        %v964 = vld [vmem:[#allocation8 + $0xa0] sm:$0xff]
        %v965 = vld [vmem:[#allocation8 + $0xa8] sm:$0xff]
        %v966 = vld [vmem:[#allocation8 + $0xb0] sm:$0xff]
        %v967 = vld [vmem:[#allocation8 + $0xb8] sm:$0xff]
        %v968 = vld [vmem:[#allocation8 + $0xc0] sm:$0xff]
        %v969 = vld [vmem:[#allocation8 + $0xc8] sm:$0xff]
        %v970 = vld [vmem:[#allocation8 + $0xd0] sm:$0xff]
        %v971 = vld [vmem:[#allocation8 + $0xd8] sm:$0xff]
        %v972 = vld [vmem:[#allocation8 + $0xe0] sm:$0xff]
        %v973 = vld [vmem:[#allocation8 + $0xe8] sm:$0xff]
        %v974 = vld [vmem:[#allocation8 + $0xf0] sm:$0xff]
        %v975 = vld [vmem:[#allocation8 + $0xf8] sm:$0xff]
        %v976 = vld [vmem:[#allocation8 + $0x100] sm:$0xff]
        %v977 = vld [vmem:[#allocation8 + $0x108] sm:$0xff]
        %v978 = vld [vmem:[#allocation8 + $0x110] sm:$0xff]
        %v979 = vld [vmem:[#allocation8 + $0x118] sm:$0xff]
        %v980 = vld [vmem:[#allocation8 + $0x120] sm:$0xff]
        %v981 = vld [vmem:[#allocation8 + $0x128] sm:$0xff]
        %v982 = vld [vmem:[#allocation8 + $0x130] sm:$0xff]
        %v983 = vld [vmem:[#allocation8 + $0x138] sm:$0xff]
        %v984 = vld [vmem:[#allocation8 + $0x140] sm:$0xff]
        %v985 = vld [vmem:[#allocation8 + $0x148] sm:$0xff]
        %v986 = vld [vmem:[#allocation8 + $0x150] sm:$0xff]
        %v987 = vld [vmem:[#allocation8 + $0x158] sm:$0xff]
        %v988 = vld [vmem:[#allocation8 + $0x160] sm:$0xff]
        %v989 = vld [vmem:[#allocation8 + $0x168] sm:$0xff]
        %v990 = vld [vmem:[#allocation8 + $0x170] sm:$0xff]
        %v991 = vld [vmem:[#allocation8 + $0x178] sm:$0xff]
        %v992 = vld [vmem:[#allocation8 + $0x180] sm:$0xff]
        %v993 = vld [vmem:[#allocation8 + $0x188] sm:$0xff]
        %v994 = vld [vmem:[#allocation8 + $0x190] sm:$0xff]
        %v995 = vld [vmem:[#allocation8 + $0x198] sm:$0xff]
        %v996 = vld [vmem:[#allocation8 + $0x1a0] sm:$0xff]
        %v997 = vld [vmem:[#allocation8 + $0x1a8] sm:$0xff]
        %v998 = vld [vmem:[#allocation8 + $0x1b0] sm:$0xff]
        %v999 = vld [vmem:[#allocation8 + $0x1b8] sm:$0xff]
        %v1000 = vld [vmem:[#allocation8 + $0x1c0] sm:$0xff]
        %v1001 = vld [vmem:[#allocation8 + $0x1c8] sm:$0xff]
        %v1002 = vld [vmem:[#allocation8 + $0x1d0] sm:$0xff]
        %v1003 = vld [vmem:[#allocation8 + $0x1d8] sm:$0xff]
        %v1004 = vld [vmem:[#allocation8 + $0x1e0] sm:$0xff]
        %v1005 = vld [vmem:[#allocation8 + $0x1e8] sm:$0xff]
        %v1006 = vld [vmem:[#allocation8 + $0x1f0] sm:$0xff]
        %v1007 = vld [vmem:[#allocation8 + $0x1f8] sm:$0xff]
        %v1009 = vrot.slane %v934, 2
        %1011 = vmatprep.subr.mxu0 %v945
        %1012 = vmatpush1.msra.mxu0 %v944
        %1013 = vmatprep.subr.mxu0 %v949
        %1014 = vmatpush1.msra.mxu0 %v948
        %1015 = vmatprep.subr.mxu0 %v953
        %1016 = vmatpush1.msra.mxu0 %v952
        %1017 = vmatprep.subr.mxu0 %v957
        %1018 = vmatpush1.msra.mxu0 %v956
        %1019 = vmatprep.subr.mxu0 %v961
        %1020 = vmatpush1.msra.mxu0 %v960
        %1021 = vmatprep.subr.mxu0 %v965
        %1022 = vmatpush1.msra.mxu0 %v964
        %1023 = vmatprep.subr.mxu0 %v969
        %1024 = vmatpush1.msra.mxu0 %v968
        %1025 = vmatprep.subr.mxu0 %v973
        %1026 = vmatpush1.msra.mxu0 %v972
        %1027 = vmatprep.subr.mxu0 %v977
        %1028 = vmatpush1.msra.mxu0 %v976
        %1029 = vmatprep.subr.mxu0 %v981
        %1030 = vmatpush1.msra.mxu0 %v980
        %1031 = vmatprep.subr.mxu0 %v985
        %1032 = vmatpush1.msra.mxu0 %v984
        %1033 = vmatprep.subr.mxu0 %v989
        %1034 = vmatpush1.msra.mxu0 %v988
        %1035 = vmatprep.subr.mxu0 %v993
        %1036 = vmatpush1.msra.mxu0 %v992
        %1037 = vmatprep.subr.mxu0 %v997
        %1038 = vmatpush1.msra.mxu0 %v996
        %1039 = vmatprep.subr.mxu0 %v1001
        %1040 = vmatpush1.msra.mxu0 %v1000
        %1041 = vmatprep.subr.mxu0 %v1005
        %1042 = vmatpush1.msra.mxu0 %v1004
        %1043 = vmatprep.subr.mxu0 0.0
        %1044 = vmatpush1.msra.mxu0 0.0
        %1045 = vmatprep.subr.mxu0 0.0
        %1046 = vmatpush1.msra.mxu0 0.0
        %1047 = vmatprep.subr.mxu0 0.0
        %1048 = vmatpush1.msra.mxu0 0.0
        %1049 = vmatprep.subr.mxu0 0.0
        %1050 = vmatpush1.msra.mxu0 0.0
        %1051 = vmatprep.subr.mxu0 0.0
        %1052 = vmatpush1.msra.mxu0 0.0
        %1053 = vmatprep.subr.mxu0 0.0
        %1054 = vmatpush1.msra.mxu0 0.0
        %1055 = vmatprep.subr.mxu0 0.0
        %1056 = vmatpush1.msra.mxu0 0.0
        %1057 = vmatprep.subr.mxu0 0.0
        %1058 = vmatpush1.msra.mxu0 0.0
        %1059 = vmatprep.subr.mxu0 0.0
        %1060 = vmatpush1.msra.mxu0 0.0
        %1061 = vmatprep.subr.mxu0 0.0
        %1062 = vmatpush1.msra.mxu0 0.0
        %1063 = vmatprep.subr.mxu0 0.0
        %1064 = vmatpush1.msra.mxu0 0.0
        %1065 = vmatprep.subr.mxu0 0.0
        %1066 = vmatpush1.msra.mxu0 0.0
        %1067 = vmatprep.subr.mxu0 0.0
        %1068 = vmatpush1.msra.mxu0 0.0
        %1069 = vmatprep.subr.mxu0 0.0
        %1070 = vmatpush1.msra.mxu0 0.0
        %1071 = vmatprep.subr.mxu0 0.0
        %1072 = vmatpush1.msra.mxu0 0.0
        %1073 = vmatprep.subr.mxu0 0.0
        %1074 = vmatpush1.msra.mxu0 0.0
        %1075 = vmatprep.mubr.f32.mxu0 0.0
        %1076 = vmatmul.mubr.f32.gmra.mrb[0].mxu0 %v1009
        %v1077 = vpop.f32.mrb[0].mxu0
        %v1078 = vadd.f32 0.0, %v1077
        %v1079 = vpop.f32.mrb[0].mxu0
        %v1080 = vadd.f32 0.0, %v1079
        %1081 = vdwg.mxu0
        %1082 = vmatprep.subr.mxu0 %v947
        %1083 = vmatpush1.msra.mxu0 %v946
        %1084 = vmatprep.subr.mxu0 %v951
        %1085 = vmatpush1.msra.mxu0 %v950
        %1086 = vmatprep.subr.mxu0 %v955
        %1087 = vmatpush1.msra.mxu0 %v954
        %1088 = vmatprep.subr.mxu0 %v959
        %1089 = vmatpush1.msra.mxu0 %v958
        %1090 = vmatprep.subr.mxu0 %v963
        %1091 = vmatpush1.msra.mxu0 %v962
        %1092 = vmatprep.subr.mxu0 %v967
        %1093 = vmatpush1.msra.mxu0 %v966
        %1094 = vmatprep.subr.mxu0 %v971
        %1095 = vmatpush1.msra.mxu0 %v970
        %1096 = vmatprep.subr.mxu0 %v975
        %1097 = vmatpush1.msra.mxu0 %v974
        %1098 = vmatprep.subr.mxu0 %v979
        %1099 = vmatpush1.msra.mxu0 %v978
        %1100 = vmatprep.subr.mxu0 %v983
        %1101 = vmatpush1.msra.mxu0 %v982
        %1102 = vmatprep.subr.mxu0 %v987
        %1103 = vmatpush1.msra.mxu0 %v986
        %1104 = vmatprep.subr.mxu0 %v991
        %1105 = vmatpush1.msra.mxu0 %v990
        %1106 = vmatprep.subr.mxu0 %v995
        %1107 = vmatpush1.msra.mxu0 %v994
        %1108 = vmatprep.subr.mxu0 %v999
        %1109 = vmatpush1.msra.mxu0 %v998
        %1110 = vmatprep.subr.mxu0 %v1003
        %1111 = vmatpush1.msra.mxu0 %v1002
        %1112 = vmatprep.subr.mxu0 %v1007
        %1113 = vmatpush1.msra.mxu0 %v1006
        %1114 = vmatprep.subr.mxu0 0.0
        %1115 = vmatpush1.msra.mxu0 0.0
        %1116 = vmatprep.subr.mxu0 0.0
        %1117 = vmatpush1.msra.mxu0 0.0
        %1118 = vmatprep.subr.mxu0 0.0
        %1119 = vmatpush1.msra.mxu0 0.0
        %1120 = vmatprep.subr.mxu0 0.0
        %1121 = vmatpush1.msra.mxu0 0.0
        %1122 = vmatprep.subr.mxu0 0.0
        %1123 = vmatpush1.msra.mxu0 0.0
        %1124 = vmatprep.subr.mxu0 0.0
        %1125 = vmatpush1.msra.mxu0 0.0
        %1126 = vmatprep.subr.mxu0 0.0
        %1127 = vmatpush1.msra.mxu0 0.0
        %1128 = vmatprep.subr.mxu0 0.0
        %1129 = vmatpush1.msra.mxu0 0.0
        %1130 = vmatprep.subr.mxu0 0.0
        %1131 = vmatpush1.msra.mxu0 0.0
        %1132 = vmatprep.subr.mxu0 0.0
        %1133 = vmatpush1.msra.mxu0 0.0
        %1134 = vmatprep.subr.mxu0 0.0
        %1135 = vmatpush1.msra.mxu0 0.0
        %1136 = vmatprep.subr.mxu0 0.0
        %1137 = vmatpush1.msra.mxu0 0.0
        %1138 = vmatprep.subr.mxu0 0.0
        %1139 = vmatpush1.msra.mxu0 0.0
        %1140 = vmatprep.subr.mxu0 0.0
        %1141 = vmatpush1.msra.mxu0 0.0
        %1142 = vmatprep.subr.mxu0 0.0
        %1143 = vmatpush1.msra.mxu0 0.0
        %1144 = vmatprep.subr.mxu0 0.0
        %1145 = vmatpush1.msra.mxu0 0.0
        %1146 = vmatprep.mubr.f32.mxu0 0.0
        %1147 = vmatmul.mubr.f32.gmra.mrb[0].mxu0 %v1009
        %v1148 = vpop.f32.mrb[0].mxu0
        %v1149 = vadd.f32 0.0, %v1148
        %v1150 = vpop.f32.mrb[0].mxu0
        %v1151 = vadd.f32 0.0, %v1150
        %1152 = vdwg.mxu0
        %v1157 = vrot.slane %v1078, 5
        %v1158 = vrot.slane %v1080, 5
        %v1159 = vrot.slane %v1149, 5
        %v1160 = vrot.slane %v1151, 5
        %v1165 = vadd.f32 %v193, %v1157
        %v1166 = vadd.f32 %v194, %v1158
        %v1167 = vadd.f32 %v195, %v1159
        %v1168 = vadd.f32 %v196, %v1160
        %v1169 = vmul.f32 %v1165, 0.5
        %v1170 = vmul.f32 %v1166, 0.5
        %v1171 = vmul.f32 %v1167, 0.5
        %v1172 = vtanh.pop %v1169
        %v1173 = vtanh.pop %v1170
        %v1174 = vtanh.pop %v1171
        %v1175 = vmul.f32 %v1172, 0.5
        %v1176 = vmul.f32 %v1173, 0.5
        %v1177 = vmul.f32 %v1174, 0.5
        %v1178 = vadd.f32 %v1175, 0.5
        %v1179 = vadd.f32 %v1176, 0.5
        %v1180 = vadd.f32 %v1177, 0.5
        %v1181 = vtanh.pop %v1168
        %v1183 = vrot.slane %v943, 5
        %v1185 = vmul.f32 %v1179, %v1183
        %v1186 = vmul.f32 %v1178, %v1181
        %v1187 = vadd.f32 %v1185, %v1186
        %v1188 = vtanh.pop %v1187
        %v1189 = vmul.f32 %v1180, %v1188
        %1190 = vst [vmem:[%s938 - $0x3] sm:$0x8] %v1187
        %s1191 = sadd.s32 %s198, 4
        %s1192 = sld [smem:[#allocation4 + %s1191]]
        %s1193 = scalar_lea.vmem [#allocation2], %s1192
        %v1194 = vld [vmem:[%s1193] sm:$0x1]
        %v1196 = vrot.slane %v1187, 3
        %v1198 = vsel %vm189, %v1194, %v1196
        %v1199 = vld [vmem:[#allocation8] sm:$0xff]
        %v1200 = vld [vmem:[#allocation8 + $0x8] sm:$0xff]
        %v1201 = vld [vmem:[#allocation8 + $0x10] sm:$0xff]
        %v1202 = vld [vmem:[#allocation8 + $0x18] sm:$0xff]
        %v1203 = vld [vmem:[#allocation8 + $0x20] sm:$0xff]
        %v1204 = vld [vmem:[#allocation8 + $0x28] sm:$0xff]
        %v1205 = vld [vmem:[#allocation8 + $0x30] sm:$0xff]
        %v1206 = vld [vmem:[#allocation8 + $0x38] sm:$0xff]
        %v1207 = vld [vmem:[#allocation8 + $0x40] sm:$0xff]
        %v1208 = vld [vmem:[#allocation8 + $0x48] sm:$0xff]
        %v1209 = vld [vmem:[#allocation8 + $0x50] sm:$0xff]
        %v1210 = vld [vmem:[#allocation8 + $0x58] sm:$0xff]
        %v1211 = vld [vmem:[#allocation8 + $0x60] sm:$0xff]
        %v1212 = vld [vmem:[#allocation8 + $0x68] sm:$0xff]
        %v1213 = vld [vmem:[#allocation8 + $0x70] sm:$0xff]
        %v1214 = vld [vmem:[#allocation8 + $0x78] sm:$0xff]
        %v1215 = vld [vmem:[#allocation8 + $0x80] sm:$0xff]
        %v1216 = vld [vmem:[#allocation8 + $0x88] sm:$0xff]
        %v1217 = vld [vmem:[#allocation8 + $0x90] sm:$0xff]
        %v1218 = vld [vmem:[#allocation8 + $0x98] sm:$0xff]
        %v1219 = vld [vmem:[#allocation8 + $0xa0] sm:$0xff]
        %v1220 = vld [vmem:[#allocation8 + $0xa8] sm:$0xff]
        %v1221 = vld [vmem:[#allocation8 + $0xb0] sm:$0xff]
        %v1222 = vld [vmem:[#allocation8 + $0xb8] sm:$0xff]
        %v1223 = vld [vmem:[#allocation8 + $0xc0] sm:$0xff]
        %v1224 = vld [vmem:[#allocation8 + $0xc8] sm:$0xff]
        %v1225 = vld [vmem:[#allocation8 + $0xd0] sm:$0xff]
        %v1226 = vld [vmem:[#allocation8 + $0xd8] sm:$0xff]
        %v1227 = vld [vmem:[#allocation8 + $0xe0] sm:$0xff]
        %v1228 = vld [vmem:[#allocation8 + $0xe8] sm:$0xff]
        %v1229 = vld [vmem:[#allocation8 + $0xf0] sm:$0xff]
        %v1230 = vld [vmem:[#allocation8 + $0xf8] sm:$0xff]
        %v1231 = vld [vmem:[#allocation8 + $0x100] sm:$0xff]
        %v1232 = vld [vmem:[#allocation8 + $0x108] sm:$0xff]
        %v1233 = vld [vmem:[#allocation8 + $0x110] sm:$0xff]
        %v1234 = vld [vmem:[#allocation8 + $0x118] sm:$0xff]
        %v1235 = vld [vmem:[#allocation8 + $0x120] sm:$0xff]
        %v1236 = vld [vmem:[#allocation8 + $0x128] sm:$0xff]
        %v1237 = vld [vmem:[#allocation8 + $0x130] sm:$0xff]
        %v1238 = vld [vmem:[#allocation8 + $0x138] sm:$0xff]
        %v1239 = vld [vmem:[#allocation8 + $0x140] sm:$0xff]
        %v1240 = vld [vmem:[#allocation8 + $0x148] sm:$0xff]
        %v1241 = vld [vmem:[#allocation8 + $0x150] sm:$0xff]
        %v1242 = vld [vmem:[#allocation8 + $0x158] sm:$0xff]
        %v1243 = vld [vmem:[#allocation8 + $0x160] sm:$0xff]
        %v1244 = vld [vmem:[#allocation8 + $0x168] sm:$0xff]
        %v1245 = vld [vmem:[#allocation8 + $0x170] sm:$0xff]
        %v1246 = vld [vmem:[#allocation8 + $0x178] sm:$0xff]
        %v1247 = vld [vmem:[#allocation8 + $0x180] sm:$0xff]
        %v1248 = vld [vmem:[#allocation8 + $0x188] sm:$0xff]
        %v1249 = vld [vmem:[#allocation8 + $0x190] sm:$0xff]
        %v1250 = vld [vmem:[#allocation8 + $0x198] sm:$0xff]
        %v1251 = vld [vmem:[#allocation8 + $0x1a0] sm:$0xff]
        %v1252 = vld [vmem:[#allocation8 + $0x1a8] sm:$0xff]
        %v1253 = vld [vmem:[#allocation8 + $0x1b0] sm:$0xff]
        %v1254 = vld [vmem:[#allocation8 + $0x1b8] sm:$0xff]
        %v1255 = vld [vmem:[#allocation8 + $0x1c0] sm:$0xff]
        %v1256 = vld [vmem:[#allocation8 + $0x1c8] sm:$0xff]
        %v1257 = vld [vmem:[#allocation8 + $0x1d0] sm:$0xff]
        %v1258 = vld [vmem:[#allocation8 + $0x1d8] sm:$0xff]
        %v1259 = vld [vmem:[#allocation8 + $0x1e0] sm:$0xff]
        %v1260 = vld [vmem:[#allocation8 + $0x1e8] sm:$0xff]
        %v1261 = vld [vmem:[#allocation8 + $0x1f0] sm:$0xff]
        %v1262 = vld [vmem:[#allocation8 + $0x1f8] sm:$0xff]
        %v1264 = vrot.slane %v1189, 3
        %1266 = vmatprep.subr.mxu0 %v1200
        %1267 = vmatpush1.msra.mxu0 %v1199
        %1268 = vmatprep.subr.mxu0 %v1204
        %1269 = vmatpush1.msra.mxu0 %v1203
        %1270 = vmatprep.subr.mxu0 %v1208
        %1271 = vmatpush1.msra.mxu0 %v1207
        %1272 = vmatprep.subr.mxu0 %v1212
        %1273 = vmatpush1.msra.mxu0 %v1211
        %1274 = vmatprep.subr.mxu0 %v1216
        %1275 = vmatpush1.msra.mxu0 %v1215
        %1276 = vmatprep.subr.mxu0 %v1220
        %1277 = vmatpush1.msra.mxu0 %v1219
        %1278 = vmatprep.subr.mxu0 %v1224
        %1279 = vmatpush1.msra.mxu0 %v1223
        %1280 = vmatprep.subr.mxu0 %v1228
        %1281 = vmatpush1.msra.mxu0 %v1227
        %1282 = vmatprep.subr.mxu0 %v1232
        %1283 = vmatpush1.msra.mxu0 %v1231
        %1284 = vmatprep.subr.mxu0 %v1236
        %1285 = vmatpush1.msra.mxu0 %v1235
        %1286 = vmatprep.subr.mxu0 %v1240
        %1287 = vmatpush1.msra.mxu0 %v1239
        %1288 = vmatprep.subr.mxu0 %v1244
        %1289 = vmatpush1.msra.mxu0 %v1243
        %1290 = vmatprep.subr.mxu0 %v1248
        %1291 = vmatpush1.msra.mxu0 %v1247
        %1292 = vmatprep.subr.mxu0 %v1252
        %1293 = vmatpush1.msra.mxu0 %v1251
        %1294 = vmatprep.subr.mxu0 %v1256
        %1295 = vmatpush1.msra.mxu0 %v1255
        %1296 = vmatprep.subr.mxu0 %v1260
        %1297 = vmatpush1.msra.mxu0 %v1259
        %1298 = vmatprep.subr.mxu0 0.0
        %1299 = vmatpush1.msra.mxu0 0.0
        %1300 = vmatprep.subr.mxu0 0.0
        %1301 = vmatpush1.msra.mxu0 0.0
        %1302 = vmatprep.subr.mxu0 0.0
        %1303 = vmatpush1.msra.mxu0 0.0
        %1304 = vmatprep.subr.mxu0 0.0
        %1305 = vmatpush1.msra.mxu0 0.0
        %1306 = vmatprep.subr.mxu0 0.0
        %1307 = vmatpush1.msra.mxu0 0.0
        %1308 = vmatprep.subr.mxu0 0.0
        %1309 = vmatpush1.msra.mxu0 0.0
        %1310 = vmatprep.subr.mxu0 0.0
        %1311 = vmatpush1.msra.mxu0 0.0
        %1312 = vmatprep.subr.mxu0 0.0
        %1313 = vmatpush1.msra.mxu0 0.0
        %1314 = vmatprep.subr.mxu0 0.0
        %1315 = vmatpush1.msra.mxu0 0.0
        %1316 = vmatprep.subr.mxu0 0.0
        %1317 = vmatpush1.msra.mxu0 0.0
        %1318 = vmatprep.subr.mxu0 0.0
        %1319 = vmatpush1.msra.mxu0 0.0
        %1320 = vmatprep.subr.mxu0 0.0
        %1321 = vmatpush1.msra.mxu0 0.0
        %1322 = vmatprep.subr.mxu0 0.0
        %1323 = vmatpush1.msra.mxu0 0.0
        %1324 = vmatprep.subr.mxu0 0.0
        %1325 = vmatpush1.msra.mxu0 0.0
        %1326 = vmatprep.subr.mxu0 0.0
        %1327 = vmatpush1.msra.mxu0 0.0
        %1328 = vmatprep.subr.mxu0 0.0
        %1329 = vmatpush1.msra.mxu0 0.0
        %1330 = vmatprep.mubr.f32.mxu0 0.0
        %1331 = vmatmul.mubr.f32.gmra.mrb[0].mxu0 %v1264
        %v1332 = vpop.f32.mrb[0].mxu0
        %v1333 = vadd.f32 0.0, %v1332
        %v1334 = vpop.f32.mrb[0].mxu0
        %v1335 = vadd.f32 0.0, %v1334
        %1336 = vdwg.mxu0
        %1337 = vmatprep.subr.mxu0 %v1202
        %1338 = vmatpush1.msra.mxu0 %v1201
        %1339 = vmatprep.subr.mxu0 %v1206
        %1340 = vmatpush1.msra.mxu0 %v1205
        %1341 = vmatprep.subr.mxu0 %v1210
        %1342 = vmatpush1.msra.mxu0 %v1209
        %1343 = vmatprep.subr.mxu0 %v1214
        %1344 = vmatpush1.msra.mxu0 %v1213
        %1345 = vmatprep.subr.mxu0 %v1218
        %1346 = vmatpush1.msra.mxu0 %v1217
        %1347 = vmatprep.subr.mxu0 %v1222
        %1348 = vmatpush1.msra.mxu0 %v1221
        %1349 = vmatprep.subr.mxu0 %v1226
        %1350 = vmatpush1.msra.mxu0 %v1225
        %1351 = vmatprep.subr.mxu0 %v1230
        %1352 = vmatpush1.msra.mxu0 %v1229
        %1353 = vmatprep.subr.mxu0 %v1234
        %1354 = vmatpush1.msra.mxu0 %v1233
        %1355 = vmatprep.subr.mxu0 %v1238
        %1356 = vmatpush1.msra.mxu0 %v1237
        %1357 = vmatprep.subr.mxu0 %v1242
        %1358 = vmatpush1.msra.mxu0 %v1241
        %1359 = vmatprep.subr.mxu0 %v1246
        %1360 = vmatpush1.msra.mxu0 %v1245
        %1361 = vmatprep.subr.mxu0 %v1250
        %1362 = vmatpush1.msra.mxu0 %v1249
        %1363 = vmatprep.subr.mxu0 %v1254
        %1364 = vmatpush1.msra.mxu0 %v1253
        %1365 = vmatprep.subr.mxu0 %v1258
        %1366 = vmatpush1.msra.mxu0 %v1257
        %1367 = vmatprep.subr.mxu0 %v1262
        %1368 = vmatpush1.msra.mxu0 %v1261
        %1369 = vmatprep.subr.mxu0 0.0
        %1370 = vmatpush1.msra.mxu0 0.0
        %1371 = vmatprep.subr.mxu0 0.0
        %1372 = vmatpush1.msra.mxu0 0.0
        %1373 = vmatprep.subr.mxu0 0.0
        %1374 = vmatpush1.msra.mxu0 0.0
        %1375 = vmatprep.subr.mxu0 0.0
        %1376 = vmatpush1.msra.mxu0 0.0
        %1377 = vmatprep.subr.mxu0 0.0
        %1378 = vmatpush1.msra.mxu0 0.0
        %1379 = vmatprep.subr.mxu0 0.0
        %1380 = vmatpush1.msra.mxu0 0.0
        %1381 = vmatprep.subr.mxu0 0.0
        %1382 = vmatpush1.msra.mxu0 0.0
        %1383 = vmatprep.subr.mxu0 0.0
        %1384 = vmatpush1.msra.mxu0 0.0
        %1385 = vmatprep.subr.mxu0 0.0
        %1386 = vmatpush1.msra.mxu0 0.0
        %1387 = vmatprep.subr.mxu0 0.0
        %1388 = vmatpush1.msra.mxu0 0.0
        %1389 = vmatprep.subr.mxu0 0.0
        %1390 = vmatpush1.msra.mxu0 0.0
        %1391 = vmatprep.subr.mxu0 0.0
        %1392 = vmatpush1.msra.mxu0 0.0
        %1393 = vmatprep.subr.mxu0 0.0
        %1394 = vmatpush1.msra.mxu0 0.0
        %1395 = vmatprep.subr.mxu0 0.0
        %1396 = vmatpush1.msra.mxu0 0.0
        %1397 = vmatprep.subr.mxu0 0.0
        %1398 = vmatpush1.msra.mxu0 0.0
        %1399 = vmatprep.subr.mxu0 0.0
        %1400 = vmatpush1.msra.mxu0 0.0
        %1401 = vmatprep.mubr.f32.mxu0 0.0
        %1402 = vmatmul.mubr.f32.gmra.mrb[0].mxu0 %v1264
        %v1403 = vpop.f32.mrb[0].mxu0
        %v1404 = vadd.f32 0.0, %v1403
        %v1405 = vpop.f32.mrb[0].mxu0
        %v1406 = vadd.f32 0.0, %v1405
        %1407 = vdwg.mxu0
        %v1412 = vrot.slane %v1333, 4
        %v1413 = vrot.slane %v1335, 4
        %v1414 = vrot.slane %v1404, 4
        %v1415 = vrot.slane %v1406, 4
        %v1420 = vadd.f32 %v193, %v1412
        %v1421 = vadd.f32 %v194, %v1413
        %v1422 = vadd.f32 %v195, %v1414
        %v1423 = vadd.f32 %v196, %v1415
        %v1424 = vmul.f32 %v1420, 0.5
        %v1425 = vmul.f32 %v1421, 0.5
        %v1426 = vmul.f32 %v1422, 0.5
        %v1427 = vtanh.pop %v1424
        %v1428 = vtanh.pop %v1425
        %v1429 = vtanh.pop %v1426
        %v1430 = vmul.f32 %v1427, 0.5
        %v1431 = vmul.f32 %v1428, 0.5
        %v1432 = vmul.f32 %v1429, 0.5
        %v1433 = vadd.f32 %v1430, 0.5
        %v1434 = vadd.f32 %v1431, 0.5
        %v1435 = vadd.f32 %v1432, 0.5
        %v1436 = vtanh.pop %v1423
        %v1438 = vrot.slane %v1198, 4
        %v1440 = vmul.f32 %v1434, %v1438
        %v1441 = vmul.f32 %v1433, %v1436
        %v1442 = vadd.f32 %v1440, %v1441
        %v1443 = vtanh.pop %v1442
        %v1444 = vmul.f32 %v1435, %v1443
        %1445 = vst [vmem:[%s1193 - $0x4] sm:$0x10] %v1442
        %s1446 = sadd.s32 %s198, 5
        %s1447 = sld [smem:[#allocation4 + %s1446]]
        %s1448 = scalar_lea.vmem [#allocation2], %s1447
        %v1449 = vld [vmem:[%s1448] sm:$0x1]
        %v1451 = vrot.slane %v1442, 4
        %v1453 = vsel %vm189, %v1449, %v1451
        %v1454 = vld [vmem:[#allocation8] sm:$0xff]
        %v1455 = vld [vmem:[#allocation8 + $0x8] sm:$0xff]
        %v1456 = vld [vmem:[#allocation8 + $0x10] sm:$0xff]
        %v1457 = vld [vmem:[#allocation8 + $0x18] sm:$0xff]
        %v1458 = vld [vmem:[#allocation8 + $0x20] sm:$0xff]
        %v1459 = vld [vmem:[#allocation8 + $0x28] sm:$0xff]
        %v1460 = vld [vmem:[#allocation8 + $0x30] sm:$0xff]
        %v1461 = vld [vmem:[#allocation8 + $0x38] sm:$0xff]
        %v1462 = vld [vmem:[#allocation8 + $0x40] sm:$0xff]
        %v1463 = vld [vmem:[#allocation8 + $0x48] sm:$0xff]
        %v1464 = vld [vmem:[#allocation8 + $0x50] sm:$0xff]
        %v1465 = vld [vmem:[#allocation8 + $0x58] sm:$0xff]
        %v1466 = vld [vmem:[#allocation8 + $0x60] sm:$0xff]
        %v1467 = vld [vmem:[#allocation8 + $0x68] sm:$0xff]
        %v1468 = vld [vmem:[#allocation8 + $0x70] sm:$0xff]
        %v1469 = vld [vmem:[#allocation8 + $0x78] sm:$0xff]
        %v1470 = vld [vmem:[#allocation8 + $0x80] sm:$0xff]
        %v1471 = vld [vmem:[#allocation8 + $0x88] sm:$0xff]
        %v1472 = vld [vmem:[#allocation8 + $0x90] sm:$0xff]
        %v1473 = vld [vmem:[#allocation8 + $0x98] sm:$0xff]
        %v1474 = vld [vmem:[#allocation8 + $0xa0] sm:$0xff]
        %v1475 = vld [vmem:[#allocation8 + $0xa8] sm:$0xff]
        %v1476 = vld [vmem:[#allocation8 + $0xb0] sm:$0xff]
        %v1477 = vld [vmem:[#allocation8 + $0xb8] sm:$0xff]
        %v1478 = vld [vmem:[#allocation8 + $0xc0] sm:$0xff]
        %v1479 = vld [vmem:[#allocation8 + $0xc8] sm:$0xff]
        %v1480 = vld [vmem:[#allocation8 + $0xd0] sm:$0xff]
        %v1481 = vld [vmem:[#allocation8 + $0xd8] sm:$0xff]
        %v1482 = vld [vmem:[#allocation8 + $0xe0] sm:$0xff]
        %v1483 = vld [vmem:[#allocation8 + $0xe8] sm:$0xff]
        %v1484 = vld [vmem:[#allocation8 + $0xf0] sm:$0xff]
        %v1485 = vld [vmem:[#allocation8 + $0xf8] sm:$0xff]
        %v1486 = vld [vmem:[#allocation8 + $0x100] sm:$0xff]
        %v1487 = vld [vmem:[#allocation8 + $0x108] sm:$0xff]
        %v1488 = vld [vmem:[#allocation8 + $0x110] sm:$0xff]
        %v1489 = vld [vmem:[#allocation8 + $0x118] sm:$0xff]
        %v1490 = vld [vmem:[#allocation8 + $0x120] sm:$0xff]
        %v1491 = vld [vmem:[#allocation8 + $0x128] sm:$0xff]
        %v1492 = vld [vmem:[#allocation8 + $0x130] sm:$0xff]
        %v1493 = vld [vmem:[#allocation8 + $0x138] sm:$0xff]
        %v1494 = vld [vmem:[#allocation8 + $0x140] sm:$0xff]
        %v1495 = vld [vmem:[#allocation8 + $0x148] sm:$0xff]
        %v1496 = vld [vmem:[#allocation8 + $0x150] sm:$0xff]
        %v1497 = vld [vmem:[#allocation8 + $0x158] sm:$0xff]
        %v1498 = vld [vmem:[#allocation8 + $0x160] sm:$0xff]
        %v1499 = vld [vmem:[#allocation8 + $0x168] sm:$0xff]
        %v1500 = vld [vmem:[#allocation8 + $0x170] sm:$0xff]
        %v1501 = vld [vmem:[#allocation8 + $0x178] sm:$0xff]
        %v1502 = vld [vmem:[#allocation8 + $0x180] sm:$0xff]
        %v1503 = vld [vmem:[#allocation8 + $0x188] sm:$0xff]
        %v1504 = vld [vmem:[#allocation8 + $0x190] sm:$0xff]
        %v1505 = vld [vmem:[#allocation8 + $0x198] sm:$0xff]
        %v1506 = vld [vmem:[#allocation8 + $0x1a0] sm:$0xff]
        %v1507 = vld [vmem:[#allocation8 + $0x1a8] sm:$0xff]
        %v1508 = vld [vmem:[#allocation8 + $0x1b0] sm:$0xff]
        %v1509 = vld [vmem:[#allocation8 + $0x1b8] sm:$0xff]
        %v1510 = vld [vmem:[#allocation8 + $0x1c0] sm:$0xff]
        %v1511 = vld [vmem:[#allocation8 + $0x1c8] sm:$0xff]
        %v1512 = vld [vmem:[#allocation8 + $0x1d0] sm:$0xff]
        %v1513 = vld [vmem:[#allocation8 + $0x1d8] sm:$0xff]
        %v1514 = vld [vmem:[#allocation8 + $0x1e0] sm:$0xff]
        %v1515 = vld [vmem:[#allocation8 + $0x1e8] sm:$0xff]
        %v1516 = vld [vmem:[#allocation8 + $0x1f0] sm:$0xff]
        %v1517 = vld [vmem:[#allocation8 + $0x1f8] sm:$0xff]
        %v1519 = vrot.slane %v1444, 4
        %1521 = vmatprep.subr.mxu0 %v1455
        %1522 = vmatpush1.msra.mxu0 %v1454
        %1523 = vmatprep.subr.mxu0 %v1459
        %1524 = vmatpush1.msra.mxu0 %v1458
        %1525 = vmatprep.subr.mxu0 %v1463
        %1526 = vmatpush1.msra.mxu0 %v1462
        %1527 = vmatprep.subr.mxu0 %v1467
        %1528 = vmatpush1.msra.mxu0 %v1466
        %1529 = vmatprep.subr.mxu0 %v1471
        %1530 = vmatpush1.msra.mxu0 %v1470
        %1531 = vmatprep.subr.mxu0 %v1475
        %1532 = vmatpush1.msra.mxu0 %v1474
        %1533 = vmatprep.subr.mxu0 %v1479
        %1534 = vmatpush1.msra.mxu0 %v1478
        %1535 = vmatprep.subr.mxu0 %v1483
        %1536 = vmatpush1.msra.mxu0 %v1482
        %1537 = vmatprep.subr.mxu0 %v1487
        %1538 = vmatpush1.msra.mxu0 %v1486
        %1539 = vmatprep.subr.mxu0 %v1491
        %1540 = vmatpush1.msra.mxu0 %v1490
        %1541 = vmatprep.subr.mxu0 %v1495
        %1542 = vmatpush1.msra.mxu0 %v1494
        %1543 = vmatprep.subr.mxu0 %v1499
        %1544 = vmatpush1.msra.mxu0 %v1498
        %1545 = vmatprep.subr.mxu0 %v1503
        %1546 = vmatpush1.msra.mxu0 %v1502
        %1547 = vmatprep.subr.mxu0 %v1507
        %1548 = vmatpush1.msra.mxu0 %v1506
        %1549 = vmatprep.subr.mxu0 %v1511
        %1550 = vmatpush1.msra.mxu0 %v1510
        %1551 = vmatprep.subr.mxu0 %v1515
        %1552 = vmatpush1.msra.mxu0 %v1514
        %1553 = vmatprep.subr.mxu0 0.0
        %1554 = vmatpush1.msra.mxu0 0.0
        %1555 = vmatprep.subr.mxu0 0.0
        %1556 = vmatpush1.msra.mxu0 0.0
        %1557 = vmatprep.subr.mxu0 0.0
        %1558 = vmatpush1.msra.mxu0 0.0
        %1559 = vmatprep.subr.mxu0 0.0
        %1560 = vmatpush1.msra.mxu0 0.0
        %1561 = vmatprep.subr.mxu0 0.0
        %1562 = vmatpush1.msra.mxu0 0.0
        %1563 = vmatprep.subr.mxu0 0.0
        %1564 = vmatpush1.msra.mxu0 0.0
        %1565 = vmatprep.subr.mxu0 0.0
        %1566 = vmatpush1.msra.mxu0 0.0
        %1567 = vmatprep.subr.mxu0 0.0
        %1568 = vmatpush1.msra.mxu0 0.0
        %1569 = vmatprep.subr.mxu0 0.0
        %1570 = vmatpush1.msra.mxu0 0.0
        %1571 = vmatprep.subr.mxu0 0.0
        %1572 = vmatpush1.msra.mxu0 0.0
        %1573 = vmatprep.subr.mxu0 0.0
        %1574 = vmatpush1.msra.mxu0 0.0
        %1575 = vmatprep.subr.mxu0 0.0
        %1576 = vmatpush1.msra.mxu0 0.0
        %1577 = vmatprep.subr.mxu0 0.0
        %1578 = vmatpush1.msra.mxu0 0.0
        %1579 = vmatprep.subr.mxu0 0.0
        %1580 = vmatpush1.msra.mxu0 0.0
        %1581 = vmatprep.subr.mxu0 0.0
        %1582 = vmatpush1.msra.mxu0 0.0
        %1583 = vmatprep.subr.mxu0 0.0
        %1584 = vmatpush1.msra.mxu0 0.0
        %1585 = vmatprep.mubr.f32.mxu0 0.0
        %1586 = vmatmul.mubr.f32.gmra.mrb[0].mxu0 %v1519
        %v1587 = vpop.f32.mrb[0].mxu0
        %v1588 = vadd.f32 0.0, %v1587
        %v1589 = vpop.f32.mrb[0].mxu0
        %v1590 = vadd.f32 0.0, %v1589
        %1591 = vdwg.mxu0
        %1592 = vmatprep.subr.mxu0 %v1457
        %1593 = vmatpush1.msra.mxu0 %v1456
        %1594 = vmatprep.subr.mxu0 %v1461
        %1595 = vmatpush1.msra.mxu0 %v1460
        %1596 = vmatprep.subr.mxu0 %v1465
        %1597 = vmatpush1.msra.mxu0 %v1464
        %1598 = vmatprep.subr.mxu0 %v1469
        %1599 = vmatpush1.msra.mxu0 %v1468
        %1600 = vmatprep.subr.mxu0 %v1473
        %1601 = vmatpush1.msra.mxu0 %v1472
        %1602 = vmatprep.subr.mxu0 %v1477
        %1603 = vmatpush1.msra.mxu0 %v1476
        %1604 = vmatprep.subr.mxu0 %v1481
        %1605 = vmatpush1.msra.mxu0 %v1480
        %1606 = vmatprep.subr.mxu0 %v1485
        %1607 = vmatpush1.msra.mxu0 %v1484
        %1608 = vmatprep.subr.mxu0 %v1489
        %1609 = vmatpush1.msra.mxu0 %v1488
        %1610 = vmatprep.subr.mxu0 %v1493
        %1611 = vmatpush1.msra.mxu0 %v1492
        %1612 = vmatprep.subr.mxu0 %v1497
        %1613 = vmatpush1.msra.mxu0 %v1496
        %1614 = vmatprep.subr.mxu0 %v1501
        %1615 = vmatpush1.msra.mxu0 %v1500
        %1616 = vmatprep.subr.mxu0 %v1505
        %1617 = vmatpush1.msra.mxu0 %v1504
        %1618 = vmatprep.subr.mxu0 %v1509
        %1619 = vmatpush1.msra.mxu0 %v1508
        %1620 = vmatprep.subr.mxu0 %v1513
        %1621 = vmatpush1.msra.mxu0 %v1512
        %1622 = vmatprep.subr.mxu0 %v1517
        %1623 = vmatpush1.msra.mxu0 %v1516
        %1624 = vmatprep.subr.mxu0 0.0
        %1625 = vmatpush1.msra.mxu0 0.0
        %1626 = vmatprep.subr.mxu0 0.0
        %1627 = vmatpush1.msra.mxu0 0.0
        %1628 = vmatprep.subr.mxu0 0.0
        %1629 = vmatpush1.msra.mxu0 0.0
        %1630 = vmatprep.subr.mxu0 0.0
        %1631 = vmatpush1.msra.mxu0 0.0
        %1632 = vmatprep.subr.mxu0 0.0
        %1633 = vmatpush1.msra.mxu0 0.0
        %1634 = vmatprep.subr.mxu0 0.0
        %1635 = vmatpush1.msra.mxu0 0.0
        %1636 = vmatprep.subr.mxu0 0.0
        %1637 = vmatpush1.msra.mxu0 0.0
        %1638 = vmatprep.subr.mxu0 0.0
        %1639 = vmatpush1.msra.mxu0 0.0
        %1640 = vmatprep.subr.mxu0 0.0
        %1641 = vmatpush1.msra.mxu0 0.0
        %1642 = vmatprep.subr.mxu0 0.0
        %1643 = vmatpush1.msra.mxu0 0.0
        %1644 = vmatprep.subr.mxu0 0.0
        %1645 = vmatpush1.msra.mxu0 0.0
        %1646 = vmatprep.subr.mxu0 0.0
        %1647 = vmatpush1.msra.mxu0 0.0
        %1648 = vmatprep.subr.mxu0 0.0
        %1649 = vmatpush1.msra.mxu0 0.0
        %1650 = vmatprep.subr.mxu0 0.0
        %1651 = vmatpush1.msra.mxu0 0.0
        %1652 = vmatprep.subr.mxu0 0.0
        %1653 = vmatpush1.msra.mxu0 0.0
        %1654 = vmatprep.subr.mxu0 0.0
        %1655 = vmatpush1.msra.mxu0 0.0
        %1656 = vmatprep.mubr.f32.mxu0 0.0
        %1657 = vmatmul.mubr.f32.gmra.mrb[0].mxu0 %v1519
        %v1658 = vpop.f32.mrb[0].mxu0
        %v1659 = vadd.f32 0.0, %v1658
        %v1660 = vpop.f32.mrb[0].mxu0
        %v1661 = vadd.f32 0.0, %v1660
        %1662 = vdwg.mxu0
        %v1667 = vrot.slane %v1588, 3
        %v1668 = vrot.slane %v1590, 3
        %v1669 = vrot.slane %v1659, 3
        %v1670 = vrot.slane %v1661, 3
        %v1675 = vadd.f32 %v193, %v1667
        %v1676 = vadd.f32 %v194, %v1668
        %v1677 = vadd.f32 %v195, %v1669
        %v1678 = vadd.f32 %v196, %v1670
        %v1679 = vmul.f32 %v1675, 0.5
        %v1680 = vmul.f32 %v1676, 0.5
        %v1681 = vmul.f32 %v1677, 0.5
        %v1682 = vtanh.pop %v1679
        %v1683 = vtanh.pop %v1680
        %v1684 = vtanh.pop %v1681
        %v1685 = vmul.f32 %v1682, 0.5
        %v1686 = vmul.f32 %v1683, 0.5
        %v1687 = vmul.f32 %v1684, 0.5
        %v1688 = vadd.f32 %v1685, 0.5
        %v1689 = vadd.f32 %v1686, 0.5
        %v1690 = vadd.f32 %v1687, 0.5
        %v1691 = vtanh.pop %v1678
        %v1693 = vrot.slane %v1453, 3
        %v1695 = vmul.f32 %v1689, %v1693
        %v1696 = vmul.f32 %v1688, %v1691
        %v1697 = vadd.f32 %v1695, %v1696
        %v1698 = vtanh.pop %v1697
        %v1699 = vmul.f32 %v1690, %v1698
        %1700 = vst [vmem:[%s1448 - $0x5] sm:$0x20] %v1697
        %s1701 = sadd.s32 %s198, 6
        %s1702 = sld [smem:[#allocation4 + %s1701]]
        %s1703 = scalar_lea.vmem [#allocation2], %s1702
        %v1704 = vld [vmem:[%s1703] sm:$0x1]
        %v1706 = vrot.slane %v1697, 5
        %v1708 = vsel %vm189, %v1704, %v1706
        %v1709 = vld [vmem:[#allocation8] sm:$0xff]
        %v1710 = vld [vmem:[#allocation8 + $0x8] sm:$0xff]
        %v1711 = vld [vmem:[#allocation8 + $0x10] sm:$0xff]
        %v1712 = vld [vmem:[#allocation8 + $0x18] sm:$0xff]
        %v1713 = vld [vmem:[#allocation8 + $0x20] sm:$0xff]
        %v1714 = vld [vmem:[#allocation8 + $0x28] sm:$0xff]
        %v1715 = vld [vmem:[#allocation8 + $0x30] sm:$0xff]
        %v1716 = vld [vmem:[#allocation8 + $0x38] sm:$0xff]
        %v1717 = vld [vmem:[#allocation8 + $0x40] sm:$0xff]
        %v1718 = vld [vmem:[#allocation8 + $0x48] sm:$0xff]
        %v1719 = vld [vmem:[#allocation8 + $0x50] sm:$0xff]
        %v1720 = vld [vmem:[#allocation8 + $0x58] sm:$0xff]
        %v1721 = vld [vmem:[#allocation8 + $0x60] sm:$0xff]
        %v1722 = vld [vmem:[#allocation8 + $0x68] sm:$0xff]
        %v1723 = vld [vmem:[#allocation8 + $0x70] sm:$0xff]
        %v1724 = vld [vmem:[#allocation8 + $0x78] sm:$0xff]
        %v1725 = vld [vmem:[#allocation8 + $0x80] sm:$0xff]
        %v1726 = vld [vmem:[#allocation8 + $0x88] sm:$0xff]
        %v1727 = vld [vmem:[#allocation8 + $0x90] sm:$0xff]
        %v1728 = vld [vmem:[#allocation8 + $0x98] sm:$0xff]
        %v1729 = vld [vmem:[#allocation8 + $0xa0] sm:$0xff]
        %v1730 = vld [vmem:[#allocation8 + $0xa8] sm:$0xff]
        %v1731 = vld [vmem:[#allocation8 + $0xb0] sm:$0xff]
        %v1732 = vld [vmem:[#allocation8 + $0xb8] sm:$0xff]
        %v1733 = vld [vmem:[#allocation8 + $0xc0] sm:$0xff]
        %v1734 = vld [vmem:[#allocation8 + $0xc8] sm:$0xff]
        %v1735 = vld [vmem:[#allocation8 + $0xd0] sm:$0xff]
        %v1736 = vld [vmem:[#allocation8 + $0xd8] sm:$0xff]
        %v1737 = vld [vmem:[#allocation8 + $0xe0] sm:$0xff]
        %v1738 = vld [vmem:[#allocation8 + $0xe8] sm:$0xff]
        %v1739 = vld [vmem:[#allocation8 + $0xf0] sm:$0xff]
        %v1740 = vld [vmem:[#allocation8 + $0xf8] sm:$0xff]
        %v1741 = vld [vmem:[#allocation8 + $0x100] sm:$0xff]
        %v1742 = vld [vmem:[#allocation8 + $0x108] sm:$0xff]
        %v1743 = vld [vmem:[#allocation8 + $0x110] sm:$0xff]
        %v1744 = vld [vmem:[#allocation8 + $0x118] sm:$0xff]
        %v1745 = vld [vmem:[#allocation8 + $0x120] sm:$0xff]
        %v1746 = vld [vmem:[#allocation8 + $0x128] sm:$0xff]
        %v1747 = vld [vmem:[#allocation8 + $0x130] sm:$0xff]
        %v1748 = vld [vmem:[#allocation8 + $0x138] sm:$0xff]
        %v1749 = vld [vmem:[#allocation8 + $0x140] sm:$0xff]
        %v1750 = vld [vmem:[#allocation8 + $0x148] sm:$0xff]
        %v1751 = vld [vmem:[#allocation8 + $0x150] sm:$0xff]
        %v1752 = vld [vmem:[#allocation8 + $0x158] sm:$0xff]
        %v1753 = vld [vmem:[#allocation8 + $0x160] sm:$0xff]
        %v1754 = vld [vmem:[#allocation8 + $0x168] sm:$0xff]
        %v1755 = vld [vmem:[#allocation8 + $0x170] sm:$0xff]
        %v1756 = vld [vmem:[#allocation8 + $0x178] sm:$0xff]
        %v1757 = vld [vmem:[#allocation8 + $0x180] sm:$0xff]
        %v1758 = vld [vmem:[#allocation8 + $0x188] sm:$0xff]
        %v1759 = vld [vmem:[#allocation8 + $0x190] sm:$0xff]
        %v1760 = vld [vmem:[#allocation8 + $0x198] sm:$0xff]
        %v1761 = vld [vmem:[#allocation8 + $0x1a0] sm:$0xff]
        %v1762 = vld [vmem:[#allocation8 + $0x1a8] sm:$0xff]
        %v1763 = vld [vmem:[#allocation8 + $0x1b0] sm:$0xff]
        %v1764 = vld [vmem:[#allocation8 + $0x1b8] sm:$0xff]
        %v1765 = vld [vmem:[#allocation8 + $0x1c0] sm:$0xff]
        %v1766 = vld [vmem:[#allocation8 + $0x1c8] sm:$0xff]
        %v1767 = vld [vmem:[#allocation8 + $0x1d0] sm:$0xff]
        %v1768 = vld [vmem:[#allocation8 + $0x1d8] sm:$0xff]
        %v1769 = vld [vmem:[#allocation8 + $0x1e0] sm:$0xff]
        %v1770 = vld [vmem:[#allocation8 + $0x1e8] sm:$0xff]
        %v1771 = vld [vmem:[#allocation8 + $0x1f0] sm:$0xff]
        %v1772 = vld [vmem:[#allocation8 + $0x1f8] sm:$0xff]
        %v1774 = vrot.slane %v1699, 5
        %1776 = vmatprep.subr.mxu0 %v1710
        %1777 = vmatpush1.msra.mxu0 %v1709
        %1778 = vmatprep.subr.mxu0 %v1714
        %1779 = vmatpush1.msra.mxu0 %v1713
        %1780 = vmatprep.subr.mxu0 %v1718
        %1781 = vmatpush1.msra.mxu0 %v1717
        %1782 = vmatprep.subr.mxu0 %v1722
        %1783 = vmatpush1.msra.mxu0 %v1721
        %1784 = vmatprep.subr.mxu0 %v1726
        %1785 = vmatpush1.msra.mxu0 %v1725
        %1786 = vmatprep.subr.mxu0 %v1730
        %1787 = vmatpush1.msra.mxu0 %v1729
        %1788 = vmatprep.subr.mxu0 %v1734
        %1789 = vmatpush1.msra.mxu0 %v1733
        %1790 = vmatprep.subr.mxu0 %v1738
        %1791 = vmatpush1.msra.mxu0 %v1737
        %1792 = vmatprep.subr.mxu0 %v1742
        %1793 = vmatpush1.msra.mxu0 %v1741
        %1794 = vmatprep.subr.mxu0 %v1746
        %1795 = vmatpush1.msra.mxu0 %v1745
        %1796 = vmatprep.subr.mxu0 %v1750
        %1797 = vmatpush1.msra.mxu0 %v1749
        %1798 = vmatprep.subr.mxu0 %v1754
        %1799 = vmatpush1.msra.mxu0 %v1753
        %1800 = vmatprep.subr.mxu0 %v1758
        %1801 = vmatpush1.msra.mxu0 %v1757
        %1802 = vmatprep.subr.mxu0 %v1762
        %1803 = vmatpush1.msra.mxu0 %v1761
        %1804 = vmatprep.subr.mxu0 %v1766
        %1805 = vmatpush1.msra.mxu0 %v1765
        %1806 = vmatprep.subr.mxu0 %v1770
        %1807 = vmatpush1.msra.mxu0 %v1769
        %1808 = vmatprep.subr.mxu0 0.0
        %1809 = vmatpush1.msra.mxu0 0.0
        %1810 = vmatprep.subr.mxu0 0.0
        %1811 = vmatpush1.msra.mxu0 0.0
        %1812 = vmatprep.subr.mxu0 0.0
        %1813 = vmatpush1.msra.mxu0 0.0
        %1814 = vmatprep.subr.mxu0 0.0
        %1815 = vmatpush1.msra.mxu0 0.0
        %1816 = vmatprep.subr.mxu0 0.0
        %1817 = vmatpush1.msra.mxu0 0.0
        %1818 = vmatprep.subr.mxu0 0.0
        %1819 = vmatpush1.msra.mxu0 0.0
        %1820 = vmatprep.subr.mxu0 0.0
        %1821 = vmatpush1.msra.mxu0 0.0
        %1822 = vmatprep.subr.mxu0 0.0
        %1823 = vmatpush1.msra.mxu0 0.0
        %1824 = vmatprep.subr.mxu0 0.0
        %1825 = vmatpush1.msra.mxu0 0.0
        %1826 = vmatprep.subr.mxu0 0.0
        %1827 = vmatpush1.msra.mxu0 0.0
        %1828 = vmatprep.subr.mxu0 0.0
        %1829 = vmatpush1.msra.mxu0 0.0
        %1830 = vmatprep.subr.mxu0 0.0
        %1831 = vmatpush1.msra.mxu0 0.0
        %1832 = vmatprep.subr.mxu0 0.0
        %1833 = vmatpush1.msra.mxu0 0.0
        %1834 = vmatprep.subr.mxu0 0.0
        %1835 = vmatpush1.msra.mxu0 0.0
        %1836 = vmatprep.subr.mxu0 0.0
        %1837 = vmatpush1.msra.mxu0 0.0
        %1838 = vmatprep.subr.mxu0 0.0
        %1839 = vmatpush1.msra.mxu0 0.0
        %1840 = vmatprep.mubr.f32.mxu0 0.0
        %1841 = vmatmul.mubr.f32.gmra.mrb[0].mxu0 %v1774
        %v1842 = vpop.f32.mrb[0].mxu0
        %v1843 = vadd.f32 0.0, %v1842
        %v1844 = vpop.f32.mrb[0].mxu0
        %v1845 = vadd.f32 0.0, %v1844
        %1846 = vdwg.mxu0
        %1847 = vmatprep.subr.mxu0 %v1712
        %1848 = vmatpush1.msra.mxu0 %v1711
        %1849 = vmatprep.subr.mxu0 %v1716
        %1850 = vmatpush1.msra.mxu0 %v1715
        %1851 = vmatprep.subr.mxu0 %v1720
        %1852 = vmatpush1.msra.mxu0 %v1719
        %1853 = vmatprep.subr.mxu0 %v1724
        %1854 = vmatpush1.msra.mxu0 %v1723
        %1855 = vmatprep.subr.mxu0 %v1728
        %1856 = vmatpush1.msra.mxu0 %v1727
        %1857 = vmatprep.subr.mxu0 %v1732
        %1858 = vmatpush1.msra.mxu0 %v1731
        %1859 = vmatprep.subr.mxu0 %v1736
        %1860 = vmatpush1.msra.mxu0 %v1735
        %1861 = vmatprep.subr.mxu0 %v1740
        %1862 = vmatpush1.msra.mxu0 %v1739
        %1863 = vmatprep.subr.mxu0 %v1744
        %1864 = vmatpush1.msra.mxu0 %v1743
        %1865 = vmatprep.subr.mxu0 %v1748
        %1866 = vmatpush1.msra.mxu0 %v1747
        %1867 = vmatprep.subr.mxu0 %v1752
        %1868 = vmatpush1.msra.mxu0 %v1751
        %1869 = vmatprep.subr.mxu0 %v1756
        %1870 = vmatpush1.msra.mxu0 %v1755
        %1871 = vmatprep.subr.mxu0 %v1760
        %1872 = vmatpush1.msra.mxu0 %v1759
        %1873 = vmatprep.subr.mxu0 %v1764
        %1874 = vmatpush1.msra.mxu0 %v1763
        %1875 = vmatprep.subr.mxu0 %v1768
        %1876 = vmatpush1.msra.mxu0 %v1767
        %1877 = vmatprep.subr.mxu0 %v1772
        %1878 = vmatpush1.msra.mxu0 %v1771
        %1879 = vmatprep.subr.mxu0 0.0
        %1880 = vmatpush1.msra.mxu0 0.0
        %1881 = vmatprep.subr.mxu0 0.0
        %1882 = vmatpush1.msra.mxu0 0.0
        %1883 = vmatprep.subr.mxu0 0.0
        %1884 = vmatpush1.msra.mxu0 0.0
        %1885 = vmatprep.subr.mxu0 0.0
        %1886 = vmatpush1.msra.mxu0 0.0
        %1887 = vmatprep.subr.mxu0 0.0
        %1888 = vmatpush1.msra.mxu0 0.0
        %1889 = vmatprep.subr.mxu0 0.0
        %1890 = vmatpush1.msra.mxu0 0.0
        %1891 = vmatprep.subr.mxu0 0.0
        %1892 = vmatpush1.msra.mxu0 0.0
        %1893 = vmatprep.subr.mxu0 0.0
        %1894 = vmatpush1.msra.mxu0 0.0
        %1895 = vmatprep.subr.mxu0 0.0
        %1896 = vmatpush1.msra.mxu0 0.0
        %1897 = vmatprep.subr.mxu0 0.0
        %1898 = vmatpush1.msra.mxu0 0.0
        %1899 = vmatprep.subr.mxu0 0.0
        %1900 = vmatpush1.msra.mxu0 0.0
        %1901 = vmatprep.subr.mxu0 0.0
        %1902 = vmatpush1.msra.mxu0 0.0
        %1903 = vmatprep.subr.mxu0 0.0
        %1904 = vmatpush1.msra.mxu0 0.0
        %1905 = vmatprep.subr.mxu0 0.0
        %1906 = vmatpush1.msra.mxu0 0.0
        %1907 = vmatprep.subr.mxu0 0.0
        %1908 = vmatpush1.msra.mxu0 0.0
        %1909 = vmatprep.subr.mxu0 0.0
        %1910 = vmatpush1.msra.mxu0 0.0
        %1911 = vmatprep.mubr.f32.mxu0 0.0
        %1912 = vmatmul.mubr.f32.gmra.mrb[0].mxu0 %v1774
        %v1913 = vpop.f32.mrb[0].mxu0
        %v1914 = vadd.f32 0.0, %v1913
        %v1915 = vpop.f32.mrb[0].mxu0
        %v1916 = vadd.f32 0.0, %v1915
        %1917 = vdwg.mxu0
        %v1922 = vrot.slane %v1843, 2
        %v1923 = vrot.slane %v1845, 2
        %v1924 = vrot.slane %v1914, 2
        %v1925 = vrot.slane %v1916, 2
        %v1930 = vadd.f32 %v193, %v1922
        %v1931 = vadd.f32 %v194, %v1923
        %v1932 = vadd.f32 %v195, %v1924
        %v1933 = vadd.f32 %v196, %v1925
        %v1934 = vmul.f32 %v1930, 0.5
        %v1935 = vmul.f32 %v1931, 0.5
        %v1936 = vmul.f32 %v1932, 0.5
        %v1937 = vtanh.pop %v1934
        %v1938 = vtanh.pop %v1935
        %v1939 = vtanh.pop %v1936
        %v1940 = vmul.f32 %v1937, 0.5
        %v1941 = vmul.f32 %v1938, 0.5
        %v1942 = vmul.f32 %v1939, 0.5
        %v1943 = vadd.f32 %v1940, 0.5
        %v1944 = vadd.f32 %v1941, 0.5
        %v1945 = vadd.f32 %v1942, 0.5
        %v1946 = vtanh.pop %v1933
        %v1948 = vrot.slane %v1708, 2
        %v1950 = vmul.f32 %v1944, %v1948
        %v1951 = vmul.f32 %v1943, %v1946
        %v1952 = vadd.f32 %v1950, %v1951
        %v1953 = vtanh.pop %v1952
        %v1954 = vmul.f32 %v1945, %v1953
        %1955 = vst [vmem:[%s1703 - $0x6] sm:$0x40] %v1952
        %s1956 = sadd.s32 %s198, 7
        %s1957 = sld [smem:[#allocation4 + %s1956]]
        %s1958 = scalar_lea.vmem [#allocation2], %s1957
        %v1959 = vld [vmem:[%s1958] sm:$0x1]
        %v1961 = vrot.slane %v1952, 6
        %v1963 = vsel %vm189, %v1959, %v1961
        %v1964 = vld [vmem:[#allocation8] sm:$0xff]
        %v1965 = vld [vmem:[#allocation8 + $0x8] sm:$0xff]
        %v1966 = vld [vmem:[#allocation8 + $0x10] sm:$0xff]
        %v1967 = vld [vmem:[#allocation8 + $0x18] sm:$0xff]
        %v1968 = vld [vmem:[#allocation8 + $0x20] sm:$0xff]
        %v1969 = vld [vmem:[#allocation8 + $0x28] sm:$0xff]
        %v1970 = vld [vmem:[#allocation8 + $0x30] sm:$0xff]
        %v1971 = vld [vmem:[#allocation8 + $0x38] sm:$0xff]
        %v1972 = vld [vmem:[#allocation8 + $0x40] sm:$0xff]
        %v1973 = vld [vmem:[#allocation8 + $0x48] sm:$0xff]
        %v1974 = vld [vmem:[#allocation8 + $0x50] sm:$0xff]
        %v1975 = vld [vmem:[#allocation8 + $0x58] sm:$0xff]
        %v1976 = vld [vmem:[#allocation8 + $0x60] sm:$0xff]
        %v1977 = vld [vmem:[#allocation8 + $0x68] sm:$0xff]
        %v1978 = vld [vmem:[#allocation8 + $0x70] sm:$0xff]
        %v1979 = vld [vmem:[#allocation8 + $0x78] sm:$0xff]
        %v1980 = vld [vmem:[#allocation8 + $0x80] sm:$0xff]
        %v1981 = vld [vmem:[#allocation8 + $0x88] sm:$0xff]
        %v1982 = vld [vmem:[#allocation8 + $0x90] sm:$0xff]
        %v1983 = vld [vmem:[#allocation8 + $0x98] sm:$0xff]
        %v1984 = vld [vmem:[#allocation8 + $0xa0] sm:$0xff]
        %v1985 = vld [vmem:[#allocation8 + $0xa8] sm:$0xff]
        %v1986 = vld [vmem:[#allocation8 + $0xb0] sm:$0xff]
        %v1987 = vld [vmem:[#allocation8 + $0xb8] sm:$0xff]
        %v1988 = vld [vmem:[#allocation8 + $0xc0] sm:$0xff]
        %v1989 = vld [vmem:[#allocation8 + $0xc8] sm:$0xff]
        %v1990 = vld [vmem:[#allocation8 + $0xd0] sm:$0xff]
        %v1991 = vld [vmem:[#allocation8 + $0xd8] sm:$0xff]
        %v1992 = vld [vmem:[#allocation8 + $0xe0] sm:$0xff]
        %v1993 = vld [vmem:[#allocation8 + $0xe8] sm:$0xff]
        %v1994 = vld [vmem:[#allocation8 + $0xf0] sm:$0xff]
        %v1995 = vld [vmem:[#allocation8 + $0xf8] sm:$0xff]
        %v1996 = vld [vmem:[#allocation8 + $0x100] sm:$0xff]
        %v1997 = vld [vmem:[#allocation8 + $0x108] sm:$0xff]
        %v1998 = vld [vmem:[#allocation8 + $0x110] sm:$0xff]
        %v1999 = vld [vmem:[#allocation8 + $0x118] sm:$0xff]
        %v2000 = vld [vmem:[#allocation8 + $0x120] sm:$0xff]
        %v2001 = vld [vmem:[#allocation8 + $0x128] sm:$0xff]
        %v2002 = vld [vmem:[#allocation8 + $0x130] sm:$0xff]
        %v2003 = vld [vmem:[#allocation8 + $0x138] sm:$0xff]
        %v2004 = vld [vmem:[#allocation8 + $0x140] sm:$0xff]
        %v2005 = vld [vmem:[#allocation8 + $0x148] sm:$0xff]
        %v2006 = vld [vmem:[#allocation8 + $0x150] sm:$0xff]
        %v2007 = vld [vmem:[#allocation8 + $0x158] sm:$0xff]
        %v2008 = vld [vmem:[#allocation8 + $0x160] sm:$0xff]
        %v2009 = vld [vmem:[#allocation8 + $0x168] sm:$0xff]
        %v2010 = vld [vmem:[#allocation8 + $0x170] sm:$0xff]
        %v2011 = vld [vmem:[#allocation8 + $0x178] sm:$0xff]
        %v2012 = vld [vmem:[#allocation8 + $0x180] sm:$0xff]
        %v2013 = vld [vmem:[#allocation8 + $0x188] sm:$0xff]
        %v2014 = vld [vmem:[#allocation8 + $0x190] sm:$0xff]
        %v2015 = vld [vmem:[#allocation8 + $0x198] sm:$0xff]
        %v2016 = vld [vmem:[#allocation8 + $0x1a0] sm:$0xff]
        %v2017 = vld [vmem:[#allocation8 + $0x1a8] sm:$0xff]
        %v2018 = vld [vmem:[#allocation8 + $0x1b0] sm:$0xff]
        %v2019 = vld [vmem:[#allocation8 + $0x1b8] sm:$0xff]
        %v2020 = vld [vmem:[#allocation8 + $0x1c0] sm:$0xff]
        %v2021 = vld [vmem:[#allocation8 + $0x1c8] sm:$0xff]
        %v2022 = vld [vmem:[#allocation8 + $0x1d0] sm:$0xff]
        %v2023 = vld [vmem:[#allocation8 + $0x1d8] sm:$0xff]
        %v2024 = vld [vmem:[#allocation8 + $0x1e0] sm:$0xff]
        %v2025 = vld [vmem:[#allocation8 + $0x1e8] sm:$0xff]
        %v2026 = vld [vmem:[#allocation8 + $0x1f0] sm:$0xff]
        %v2027 = vld [vmem:[#allocation8 + $0x1f8] sm:$0xff]
        %v2029 = vrot.slane %v1954, 6
        %2031 = vmatprep.subr.mxu0 %v1965
        %2032 = vmatpush1.msra.mxu0 %v1964
        %2033 = vmatprep.subr.mxu0 %v1969
        %2034 = vmatpush1.msra.mxu0 %v1968
        %2035 = vmatprep.subr.mxu0 %v1973
        %2036 = vmatpush1.msra.mxu0 %v1972
        %2037 = vmatprep.subr.mxu0 %v1977
        %2038 = vmatpush1.msra.mxu0 %v1976
        %2039 = vmatprep.subr.mxu0 %v1981
        %2040 = vmatpush1.msra.mxu0 %v1980
        %2041 = vmatprep.subr.mxu0 %v1985
        %2042 = vmatpush1.msra.mxu0 %v1984
        %2043 = vmatprep.subr.mxu0 %v1989
        %2044 = vmatpush1.msra.mxu0 %v1988
        %2045 = vmatprep.subr.mxu0 %v1993
        %2046 = vmatpush1.msra.mxu0 %v1992
        %2047 = vmatprep.subr.mxu0 %v1997
        %2048 = vmatpush1.msra.mxu0 %v1996
        %2049 = vmatprep.subr.mxu0 %v2001
        %2050 = vmatpush1.msra.mxu0 %v2000
        %2051 = vmatprep.subr.mxu0 %v2005
        %2052 = vmatpush1.msra.mxu0 %v2004
        %2053 = vmatprep.subr.mxu0 %v2009
        %2054 = vmatpush1.msra.mxu0 %v2008
        %2055 = vmatprep.subr.mxu0 %v2013
        %2056 = vmatpush1.msra.mxu0 %v2012
        %2057 = vmatprep.subr.mxu0 %v2017
        %2058 = vmatpush1.msra.mxu0 %v2016
        %2059 = vmatprep.subr.mxu0 %v2021
        %2060 = vmatpush1.msra.mxu0 %v2020
        %2061 = vmatprep.subr.mxu0 %v2025
        %2062 = vmatpush1.msra.mxu0 %v2024
        %2063 = vmatprep.subr.mxu0 0.0
        %2064 = vmatpush1.msra.mxu0 0.0
        %2065 = vmatprep.subr.mxu0 0.0
        %2066 = vmatpush1.msra.mxu0 0.0
        %2067 = vmatprep.subr.mxu0 0.0
        %2068 = vmatpush1.msra.mxu0 0.0
        %2069 = vmatprep.subr.mxu0 0.0
        %2070 = vmatpush1.msra.mxu0 0.0
        %2071 = vmatprep.subr.mxu0 0.0
        %2072 = vmatpush1.msra.mxu0 0.0
        %2073 = vmatprep.subr.mxu0 0.0
        %2074 = vmatpush1.msra.mxu0 0.0
        %2075 = vmatprep.subr.mxu0 0.0
        %2076 = vmatpush1.msra.mxu0 0.0
        %2077 = vmatprep.subr.mxu0 0.0
        %2078 = vmatpush1.msra.mxu0 0.0
        %2079 = vmatprep.subr.mxu0 0.0
        %2080 = vmatpush1.msra.mxu0 0.0
        %2081 = vmatprep.subr.mxu0 0.0
        %2082 = vmatpush1.msra.mxu0 0.0
        %2083 = vmatprep.subr.mxu0 0.0
        %2084 = vmatpush1.msra.mxu0 0.0
        %2085 = vmatprep.subr.mxu0 0.0
        %2086 = vmatpush1.msra.mxu0 0.0
        %2087 = vmatprep.subr.mxu0 0.0
        %2088 = vmatpush1.msra.mxu0 0.0
        %2089 = vmatprep.subr.mxu0 0.0
        %2090 = vmatpush1.msra.mxu0 0.0
        %2091 = vmatprep.subr.mxu0 0.0
        %2092 = vmatpush1.msra.mxu0 0.0
        %2093 = vmatprep.subr.mxu0 0.0
        %2094 = vmatpush1.msra.mxu0 0.0
        %2095 = vmatprep.mubr.f32.mxu0 0.0
        %2096 = vmatmul.mubr.f32.gmra.mrb[0].mxu0 %v2029
        %v2097 = vpop.f32.mrb[0].mxu0
        %v2098 = vadd.f32 0.0, %v2097
        %v2099 = vpop.f32.mrb[0].mxu0
        %v2100 = vadd.f32 0.0, %v2099
        %2101 = vdwg.mxu0
        %2102 = vmatprep.subr.mxu0 %v1967
        %2103 = vmatpush1.msra.mxu0 %v1966
        %2104 = vmatprep.subr.mxu0 %v1971
        %2105 = vmatpush1.msra.mxu0 %v1970
        %2106 = vmatprep.subr.mxu0 %v1975
        %2107 = vmatpush1.msra.mxu0 %v1974
        %2108 = vmatprep.subr.mxu0 %v1979
        %2109 = vmatpush1.msra.mxu0 %v1978
        %2110 = vmatprep.subr.mxu0 %v1983
        %2111 = vmatpush1.msra.mxu0 %v1982
        %2112 = vmatprep.subr.mxu0 %v1987
        %2113 = vmatpush1.msra.mxu0 %v1986
        %2114 = vmatprep.subr.mxu0 %v1991
        %2115 = vmatpush1.msra.mxu0 %v1990
        %2116 = vmatprep.subr.mxu0 %v1995
        %2117 = vmatpush1.msra.mxu0 %v1994
        %2118 = vmatprep.subr.mxu0 %v1999
        %2119 = vmatpush1.msra.mxu0 %v1998
        %2120 = vmatprep.subr.mxu0 %v2003
        %2121 = vmatpush1.msra.mxu0 %v2002
        %2122 = vmatprep.subr.mxu0 %v2007
        %2123 = vmatpush1.msra.mxu0 %v2006
        %2124 = vmatprep.subr.mxu0 %v2011
        %2125 = vmatpush1.msra.mxu0 %v2010
        %2126 = vmatprep.subr.mxu0 %v2015
        %2127 = vmatpush1.msra.mxu0 %v2014
        %2128 = vmatprep.subr.mxu0 %v2019
        %2129 = vmatpush1.msra.mxu0 %v2018
        %2130 = vmatprep.subr.mxu0 %v2023
        %2131 = vmatpush1.msra.mxu0 %v2022
        %2132 = vmatprep.subr.mxu0 %v2027
        %2133 = vmatpush1.msra.mxu0 %v2026
        %2134 = vmatprep.subr.mxu0 0.0
        %2135 = vmatpush1.msra.mxu0 0.0
        %2136 = vmatprep.subr.mxu0 0.0
        %2137 = vmatpush1.msra.mxu0 0.0
        %2138 = vmatprep.subr.mxu0 0.0
        %2139 = vmatpush1.msra.mxu0 0.0
        %2140 = vmatprep.subr.mxu0 0.0
        %2141 = vmatpush1.msra.mxu0 0.0
        %2142 = vmatprep.subr.mxu0 0.0
        %2143 = vmatpush1.msra.mxu0 0.0
        %2144 = vmatprep.subr.mxu0 0.0
        %2145 = vmatpush1.msra.mxu0 0.0
        %2146 = vmatprep.subr.mxu0 0.0
        %2147 = vmatpush1.msra.mxu0 0.0
        %2148 = vmatprep.subr.mxu0 0.0
        %2149 = vmatpush1.msra.mxu0 0.0
        %2150 = vmatprep.subr.mxu0 0.0
        %2151 = vmatpush1.msra.mxu0 0.0
        %2152 = vmatprep.subr.mxu0 0.0
        %2153 = vmatpush1.msra.mxu0 0.0
        %2154 = vmatprep.subr.mxu0 0.0
        %2155 = vmatpush1.msra.mxu0 0.0
        %2156 = vmatprep.subr.mxu0 0.0
        %2157 = vmatpush1.msra.mxu0 0.0
        %2158 = vmatprep.subr.mxu0 0.0
        %2159 = vmatpush1.msra.mxu0 0.0
        %2160 = vmatprep.subr.mxu0 0.0
        %2161 = vmatpush1.msra.mxu0 0.0
        %2162 = vmatprep.subr.mxu0 0.0
        %2163 = vmatpush1.msra.mxu0 0.0
        %2164 = vmatprep.subr.mxu0 0.0
        %2165 = vmatpush1.msra.mxu0 0.0
        %2166 = vmatprep.mubr.f32.mxu0 0.0
        %2167 = vmatmul.mubr.f32.gmra.mrb[0].mxu0 %v2029
        %v2168 = vpop.f32.mrb[0].mxu0
        %v2169 = vadd.f32 0.0, %v2168
        %v2170 = vpop.f32.mrb[0].mxu0
        %v2171 = vadd.f32 0.0, %v2170
        %2172 = vdwg.mxu0
        %v2177 = vrot.slane %v2098, 1
        %v2178 = vrot.slane %v2100, 1
        %v2179 = vrot.slane %v2169, 1
        %v2180 = vrot.slane %v2171, 1
        %v2185 = vadd.f32 %v193, %v2177
        %v2186 = vadd.f32 %v194, %v2178
        %v2187 = vadd.f32 %v195, %v2179
        %v2188 = vadd.f32 %v196, %v2180
        %v2189 = vmul.f32 %v2185, 0.5
        %v2190 = vmul.f32 %v2186, 0.5
        %v2191 = vmul.f32 %v2187, 0.5
        %v2192 = vtanh.pop %v2189
        %v2193 = vtanh.pop %v2190
        %v2194 = vtanh.pop %v2191
        %v2195 = vmul.f32 %v2192, 0.5
        %v2196 = vmul.f32 %v2193, 0.5
        %v2197 = vmul.f32 %v2194, 0.5
        %v2198 = vadd.f32 %v2195, 0.5
        %v2199 = vadd.f32 %v2196, 0.5
        %v2200 = vadd.f32 %v2197, 0.5
        %v2201 = vtanh.pop %v2188
        %v2203 = vrot.slane %v1963, 1
        %v2205 = vmul.f32 %v2199, %v2203
        %v2206 = vmul.f32 %v2198, %v2201
        %v2207 = vadd.f32 %v2205, %v2206
        %v2208 = vtanh.pop %v2207
        %v2209 = vmul.f32 %v2200, %v2208
        %2210 = vst [vmem:[%s1958 - $0x7] sm:$0x80] %v2207
        %vm2211 = vcmask 1040384
        %v2212 = vsel %vm2211, %v430, %v679
        %vm2213 = vcmask 1041408
        %v2214 = vsel %vm2213, %v2212, %v934
        %vm2215 = vcmask 1042432
        %v2216 = vsel %vm2215, %v2214, %v1189
        %vm2217 = vcmask 1043456
        %v2218 = vsel %vm2217, %v2216, %v1444
        %vm2219 = vcmask 1044480
        %v2220 = vsel %vm2219, %v2218, %v1699
        %vm2221 = vcmask 1045504
        %v2222 = vsel %vm2221, %v2220, %v1954
        %vm2223 = vcmask 1046528
        %v2224 = vsel %vm2223, %v2222, %v2209
        %2225 = vst [vmem:[%s179] sm:$0xff] %v2224
        %s2226 = sand.u32 %s80, 1
        %s2227 = scalar_lea.sflag [#allocation7], %s2226
        %s2228 = sand.u32 %s80, 1
        %s2229 = smul.addr %s2228, 8
        %s2230 = scalar_lea.vmem [#allocation10], %s2229
        // Predicated region
        $region41: #{tpu_custom_call.1} parent=27 // pred_check
          %p2231 = pneg %p90
        $region42: #{tpu_custom_call.1} parent=27 // pred_check_branch
          %2233 = sbr.rel (%p2231) target = $region44
        $region43: #{tpu_custom_call.1} parent=27 // pred_region
          %s2235 = ssub.s32 128, 128
          %2236 = vsyncadd %s2227, %s2235
          %s2237 = smul.addr %s25, 128
          %s2238 = scalar_lea.hbm %s3, %s2237
          %s2240 = sshll.u32 %s2230, 4
          %s2241 = int_to_ptr.vmem [resolvable:$true] %s2240
          %2243 = dma.vmem_to_hbm [thread:$0]  %s2241, 128, %s2238, %s2227
        $region44: #{tpu_custom_call.1} parent=27 // pred_fallthru
          _
      $region28: #{tpu_custom_call.1} parent=5 // pred_fallthru
        _
      %p2244 = scmp.le.s32.totalorder 2, %s20
      // Predicated region
      $region45: #{tpu_custom_call.1} parent=5 // pred_check
        %p2245 = pneg %p2244
      $region46: #{tpu_custom_call.1} parent=5 // pred_check_branch
        %2247 = sbr.rel (%p2245) target = $region48
      $region47: #{tpu_custom_call.1} parent=5 // pred_region
        %s2248 = ssub.s32 %s20, 2
        // Predicated region
        $region49: #{tpu_custom_call.1} parent=47 // pred_check
          %p2249 = pneg %p96
        $region50: #{tpu_custom_call.1} parent=47 // pred_check_branch
          %2251 = sbr.rel (%p2249) target = $region52
        $region51: #{tpu_custom_call.1} parent=47 // pred_region
          %s2252 = sand.u32 %s81, 1
          %s2253 = scalar_lea.sflag [#allocation7], %s2252
          %s2254 = sand.u32 %s81, 1
          %s2255 = smul.addr %s2254, 8
          %s2256 = scalar_lea.vmem [#allocation10], %s2255
          %2257 = dma.done %s2253, 128
        $region52: #{tpu_custom_call.1} parent=47 // pred_fallthru
          _
      $region48: #{tpu_custom_call.1} parent=5 // pred_fallthru
        _
    $region6: #{tpu_custom_call.1} parent=1 // loop_footer
      %s24 = sadd.s32 1, %s20
    $region7: #{tpu_custom_call.1} parent=1 // loop_footer_branch
      %19 = sbr.rel target = $region3
    $region8: #{tpu_custom_call.1} parent=1 // loop_exit
      _
    %2258 = vsyncpa [#allocation6], 1
    %s2259 = scalar_lea.sflag [#allocation6], 1
    %2260 = vsyncpa %s2259, 1
    %2261 = vsyncpa [#allocation9], 1
    %2262 = vsyncpa [#allocation7], 1
    %s2263 = scalar_lea.sflag [#allocation7], 1
    %2264 = vsyncpa %s2263, 1

</llo_original>
